<compile_context>
chip_gen: v6e
topology: v6e:2x2x1
jax: 0.10.0
libtpu: 0.0.40
codegen_flags: <defaults>
</compile_context>

<pallas_src>
import functools

import jax
import jax.numpy as jnp
from jax.experimental import pallas as pl
from jax.experimental.pallas import tpu as pltpu


def _layer_norm(x, g, b, eps=1e-5):
    # PyTorch nn.LayerNorm over the last dim (biased variance, eps=1e-5), f32 math.
    m = jnp.mean(x, axis=-1, keepdims=True)
    v = jnp.mean(jnp.square(x - m), axis=-1, keepdims=True)
    return (x - m) * jax.lax.rsqrt(v + eps) * g + b


def _gelu_exact(x):
    # nn.GELU() default (exact, erf-based): 0.5 * x * (1 + erf(x / sqrt(2)))
    return 0.5 * x * (1.0 + jax.lax.erf(x * 0.7071067811865476))


def _encoder_kernel(
    x_ref, mb_ref,
    wqkv, bqkv, wo, bo,
    aln_g, aln_b, fln_g, fln_b,
    w1, b1, w2, b2,
    n1_g, n1_b, n2_g, n2_b,
    o_ref,
    *, S, H, hd, scale, kv_block):
    """Grid = (batch, layer).  One step == one (sequence, layer).  The running activation for
    the current sequence lives in o_ref (same output block index across the layer axis)."""
    l = pl.program_id(1)
    hs = H * hd

    # First layer: load the embedded input into the resident output block.
    @pl.when(l == 0)
    def _():
        o_ref[...] = x_ref[...]

    x = o_ref[0]                                     # (S, D) f32 running activation
    D = x.shape[-1]

    # ---------------- Attention sublayer: x = attn(x,x,x,mask) + x ; x = norm1(x) --------
    xn = _layer_norm(x, aln_g[0], aln_b[0])          # Attention's own pre-norm (f32)

    # Single wide fused QKV projection: (S, D) @ (D, 3*hs), bf16 operands, f32 accumulate.
    qkv = jnp.dot(xn.astype(jnp.bfloat16), wqkv[0],
                  preferred_element_type=jnp.float32) + bqkv[0]     # (S, 3*hs) f32

    bias = mb_ref[0]                                 # (1, S) additive key mask (0 / -1e20)
    nkv = S // kv_block

    attn_out = jnp.zeros((S, D), jnp.float32)        # per-head output-proj accumulator
    for h in range(H):                               # H is small & static (unrolled)
        qh = qkv[:, h * hd:(h + 1) * hd] * scale     # scale folded into q
        kh = qkv[:, hs + h * hd: hs + (h + 1) * hd]
        vh = qkv[:, 2 * hs + h * hd: 2 * hs + (h + 1) * hd]

        # Flash-style online softmax over KV chunks: scores only exist per (S, kv_block).
        m_i = jnp.full((S, 1), -jnp.inf, jnp.float32)
        l_i = jnp.zeros((S, 1), jnp.float32)
        acc = jnp.zeros((S, hd), jnp.float32)
        for i in range(nkv):
            ks = kh[i * kv_block:(i + 1) * kv_block, :]
            vs = vh[i * kv_block:(i + 1) * kv_block, :]
            s = jax.lax.dot_general(                  # q @ k^T for this KV chunk
                qh.astype(jnp.bfloat16), ks.astype(jnp.bfloat16),
                (((1,), (1,)), ((), ())),
                preferred_element_type=jnp.float32)   # (S, kv_block)
            s = s + bias[:, i * kv_block:(i + 1) * kv_block]
            m_new = jnp.maximum(m_i, jnp.max(s, axis=-1, keepdims=True))
            alpha = jnp.exp(m_i - m_new)
            p = jnp.exp(s - m_new)
            l_i = alpha * l_i + jnp.sum(p, axis=-1, keepdims=True)
            acc = alpha * acc + jnp.dot(p.astype(jnp.bfloat16), vs.astype(jnp.bfloat16),
                                        preferred_element_type=jnp.float32)
            m_i = m_new

        ctx = acc * pl.reciprocal(l_i, approx=True)   # (S, hd)
        # Output projection, accumulated per head (sum_h ctx_h @ Wo_h == concat(heads) @ Wo);
        # never materializes an (H, S, D) intermediate.
        attn_out = attn_out + jnp.dot(ctx.astype(jnp.bfloat16), wo[0, h],
                                      preferred_element_type=jnp.float32)

    x = attn_out + bo[0] + x
    x = _layer_norm(x, n1_g[...], n1_b[...])          # shared Encoder.norm1

    # ---------------- FeedForward sublayer: x = ff(x) + x ; x = norm2(x) -----------------
    xn2 = _layer_norm(x, fln_g[0], fln_b[0])          # FF's own pre-LayerNorm
    h1 = jnp.dot(xn2.astype(jnp.bfloat16), w1[0],
                 preferred_element_type=jnp.float32) + b1[0]
    h1 = _gelu_exact(h1)
    y = jnp.dot(h1.astype(jnp.bfloat16), w2[0],
                preferred_element_type=jnp.float32) + b2[0]
    x = y + x
    x = _layer_norm(x, n2_g[...], n2_b[...])          # shared Encoder.norm2

    o_ref[0] = x                                      # stays resident until batch block changes


def init_params(key, vocab_size, max_len_seq, input_size, depth, hidden_dim,
                head_dim, num_heads):
    D, H, hd = input_size, num_heads, head_dim
    hs = H * hd
    kit = iter(jax.random.split(key, 2 + 6 * depth))

    def nrm(shape):
        return 0.02 * jax.random.normal(next(kit), shape, jnp.float32)

    params = {"embedding": nrm((vocab_size, D))}

    # Utils.get_pos_embed_test (sinusoidal), stored as the nn.Parameter pos_embed
    pos = jnp.arange(max_len_seq, dtype=jnp.float32)[:, None]
    div = jnp.power(10000.0, -jnp.arange(0, D, 2, dtype=jnp.float32) / D)
    pe = jnp.zeros((max_len_seq, D), jnp.float32)
    pe = pe.at[:, 0::2].set(jnp.sin(pos * div))
    pe = pe.at[:, 1::2].set(jnp.cos(pos * div))
    params["pos_embed"] = pe[None]                                   # (1, S, D)

    wqkv_l, bqkv_l, wo_l, bo_l = [], [], [], []
    w1_l, b1_l, w2_l, b2_l = [], [], [], []
    for _ in range(depth):
        wq, wk, wv = nrm((D, hs)), nrm((D, hs)), nrm((D, hs))
        bq = jnp.zeros((hs,)); bk = jnp.zeros((hs,)); bv = jnp.zeros((hs,))
        wqkv_l.append(jnp.concatenate([wq, wk, wv], axis=-1))        # (D, 3*hs)
        bqkv_l.append(jnp.concatenate([bq, bk, bv]).reshape(1, 3 * hs))
        wo_l.append(nrm((hs, D)).reshape(H, hd, D))                  # (H, hd, D)
        bo_l.append(jnp.zeros((1, D)))
        w1_l.append(nrm((D, hidden_dim)))
        b1_l.append(jnp.zeros((1, hidden_dim)))
        w2_l.append(nrm((hidden_dim, D)))
        b2_l.append(jnp.zeros((1, D)))

    # Stacked per-layer params (leading depth axis); matmul weights stored bf16
    # (halves weight DMA), biases / LayerNorm params stay f32.
    params["wqkv"] = jnp.stack(wqkv_l).astype(jnp.bfloat16)   # (depth, D, 3*hs)
    params["bqkv"] = jnp.stack(bqkv_l)                        # (depth, 1, 3*hs)
    params["wo"] = jnp.stack(wo_l).astype(jnp.bfloat16)       # (depth, H, hd, D)
    params["bo"] = jnp.stack(bo_l)                            # (depth, 1, D)
    params["aln_g"] = jnp.ones((depth, 1, D))
    params["aln_b"] = jnp.zeros((depth, 1, D))
    params["fln_g"] = jnp.ones((depth, 1, D))
    params["fln_b"] = jnp.zeros((depth, 1, D))
    params["w1"] = jnp.stack(w1_l).astype(jnp.bfloat16)       # (depth, D, hidden)
    params["b1"] = jnp.stack(b1_l)                            # (depth, 1, hidden)
    params["w2"] = jnp.stack(w2_l).astype(jnp.bfloat16)       # (depth, hidden, D)
    params["b2"] = jnp.stack(b2_l)                            # (depth, 1, D)
    # Encoder.norm1 / norm2 are single modules shared by every layer.
    params["n1_g"] = jnp.ones((1, D))
    params["n1_b"] = jnp.zeros((1, D))
    params["n2_g"] = jnp.ones((1, D))
    params["n2_b"] = jnp.zeros((1, D))
    return params


def encoder_forward(token_ids, params, num_heads, head_dim):
    # Glue kept in plain JAX: embedding gather + positional embedding add (dropout p=0).
    emb = jnp.take(params["embedding"], token_ids, axis=0)               # (B, S, D)
    x = (emb + params["pos_embed"]).astype(jnp.float32)
    B, S, D = x.shape
    H, hd = num_heads, head_dim
    depth = params["wqkv"].shape[0]

    # Utils.make_src_mask (tokens != pad_index) as a precomputed ADDITIVE f32 bias
    # over key positions: 0 for real tokens, -1e20 for pads.  Shape (B, 1, S).
    mask_bias = jnp.where(token_ids == 0, -1e20, 0.0).astype(jnp.float32)[:, None, :]

    # KV chunk for the online softmax (flash-style).  Full-length block if S is small
    # or not a multiple of the chunk.
    kv_block = 512 if (S > 512 and S % 512 == 0) else S

    stacked_names = ("wqkv", "bqkv", "wo", "bo", "aln_g", "aln_b",
                     "fln_g", "fln_b", "w1", "b1", "w2", "b2")
    shared_names = ("n1_g", "n1_b", "n2_g", "n2_b")
    stacked = [params[n] for n in stacked_names]
    shared = [params[n] for n in shared_names]

    def layer_spec(arr):   # one layer's slice per grid step, pipelined across layers
        nd = arr.ndim
        return pl.BlockSpec((1,) + arr.shape[1:],
                            lambda b, l, nd=nd: (l,) + (0,) * (nd - 1))

    def const_spec(arr):   # resident for the whole kernel
        nd = arr.ndim
        return pl.BlockSpec(arr.shape, lambda b, l, nd=nd: (0,) * nd)

    in_specs = ([pl.BlockSpec((1, S, D), lambda b, l: (b, 0, 0)),
                 pl.BlockSpec((1, 1, S), lambda b, l: (b, 0, 0))]
                + [layer_spec(a) for a in stacked]
                + [const_spec(a) for a in shared])

    kernel = functools.partial(_encoder_kernel, S=S, H=H, hd=hd,
                               scale=hd ** (-0.5), kv_block=kv_block)

    # Generation-appropriate VMEM budget: physical capacity minus headroom for Mosaic's
    # internal scratch (v7x: ~56 MiB of 64; v5e/v6e: 112 MiB of 128).
    try:
        vmem_cap = int(pltpu.get_tpu_info().vmem_capacity_bytes)
    except Exception:
        vmem_cap = 64 * 1024 * 1024
    vmem_limit = min(vmem_cap * 7 // 8, 112 * 1024 * 1024)

    out = pl.pallas_call(
        kernel,
        out_shape=jax.ShapeDtypeStruct((B, S, D), jnp.float32),
        grid=(B, depth),
        in_specs=in_specs,
        # Constant block index across the layer axis => the output block is the resident
        # layer-to-layer accumulator; it is written back to HBM when the batch block changes.
        out_specs=pl.BlockSpec((1, S, D), lambda b, l: (b, 0, 0)),
        compiler_params=pltpu.CompilerParams(
            dimension_semantics=("parallel", "arbitrary"),   # batch sharded, layers sequential
            vmem_limit_bytes=vmem_limit),
    )(x, mask_bias, *stacked, *shared)
    return out


if __name__ == "__main__":
    # Small, module-consistent shapes (functional test only; production shapes should use
    # D / hidden / hs / S as multiples of 128 for lane-dense stores and full MXU tiles).
    vocab_size, max_len_seq, input_size = 32, 8, 32
    depth, hidden_dim, head_dim, num_heads = 2, 64, 16, 2
    B, S = 2, max_len_seq

    key = jax.random.PRNGKey(0)
    pkey, dkey = jax.random.split(key)
    params = init_params(pkey, vocab_size, max_len_seq, input_size, depth,
                         hidden_dim, head_dim, num_heads)

    ids = jax.random.randint(dkey, (B, S), 0, vocab_size)
    ids = ids.at[0, -2:].set(0)   # inject pad tokens so the src mask is exercised

    out = encoder_forward(ids, params, num_heads, head_dim)
    jax.block_until_ready(out)
    assert out.shape == (B, S, input_size) and out.dtype == jnp.float32
    print("KERNEL_OK")
</pallas_src>

<mosaic_0001>
module attributes {stable_mosaic.version = 11 : i64} {
  func.func @_encoder_kernel(%arg0: i32, %arg1: i32, %arg2: memref<1x8x32xf32, #tpu.memory_space<vmem>>, %arg3: memref<1x1x8xf32, #tpu.memory_space<vmem>>, %arg4: memref<1x32x96xbf16, #tpu.memory_space<vmem>>, %arg5: memref<1x1x96xf32, #tpu.memory_space<vmem>>, %arg6: memref<1x2x16x32xbf16, #tpu.memory_space<vmem>>, %arg7: memref<1x1x32xf32, #tpu.memory_space<vmem>>, %arg8: memref<1x1x32xf32, #tpu.memory_space<vmem>>, %arg9: memref<1x1x32xf32, #tpu.memory_space<vmem>>, %arg10: memref<1x1x32xf32, #tpu.memory_space<vmem>>, %arg11: memref<1x1x32xf32, #tpu.memory_space<vmem>>, %arg12: memref<1x32x64xbf16, #tpu.memory_space<vmem>>, %arg13: memref<1x1x64xf32, #tpu.memory_space<vmem>>, %arg14: memref<1x64x32xbf16, #tpu.memory_space<vmem>>, %arg15: memref<1x1x32xf32, #tpu.memory_space<vmem>>, %arg16: memref<1x32xf32, #tpu.memory_space<vmem>>, %arg17: memref<1x32xf32, #tpu.memory_space<vmem>>, %arg18: memref<1x32xf32, #tpu.memory_space<vmem>>, %arg19: memref<1x32xf32, #tpu.memory_space<vmem>>, %arg20: memref<1x8x32xf32, #tpu.memory_space<vmem>>) attributes {dimension_semantics = [#tpu.dimension_semantics<parallel>, #tpu.dimension_semantics<arbitrary>], iteration_bounds = array<i64: 2, 2>, scalar_prefetch = 0 : i64, scratch_operands = 0 : i64, tpu.core_type = #tpu.core_type<tc>, window_params = [{transform_indices = @transform_0, window_bounds = array<i64: 1, 8, 32>}, {transform_indices = @transform_1, window_bounds = array<i64: 1, 1, 8>}, {transform_indices = @transform_2, window_bounds = array<i64: 1, 32, 96>}, {transform_indices = @transform_3, window_bounds = array<i64: 1, 1, 96>}, {transform_indices = @transform_4, window_bounds = array<i64: 1, 2, 16, 32>}, {transform_indices = @transform_5, window_bounds = array<i64: 1, 1, 32>}, {transform_indices = @transform_6, window_bounds = array<i64: 1, 1, 32>}, {transform_indices = @transform_7, window_bounds = array<i64: 1, 1, 32>}, {transform_indices = @transform_8, window_bounds = array<i64: 1, 1, 32>}, {transform_indices = @transform_9, window_bounds = array<i64: 1, 1, 32>}, {transform_indices = @transform_10, window_bounds = array<i64: 1, 32, 64>}, {transform_indices = @transform_11, window_bounds = array<i64: 1, 1, 64>}, {transform_indices = @transform_12, window_bounds = array<i64: 1, 64, 32>}, {transform_indices = @transform_13, window_bounds = array<i64: 1, 1, 32>}, {pipeline_mode = #tpu.pipeline_mode<synchronous>, transform_indices = @transform_14, window_bounds = array<i64: 1, 32>}, {pipeline_mode = #tpu.pipeline_mode<synchronous>, transform_indices = @transform_15, window_bounds = array<i64: 1, 32>}, {pipeline_mode = #tpu.pipeline_mode<synchronous>, transform_indices = @transform_16, window_bounds = array<i64: 1, 32>}, {pipeline_mode = #tpu.pipeline_mode<synchronous>, transform_indices = @transform_17, window_bounds = array<i64: 1, 32>}, {transform_indices = @transform_18, window_bounds = array<i64: 1, 8, 32>}]} {
    %c0_i32 = arith.constant 0 : i32
    %0 = arith.cmpi eq, %arg1, %c0_i32 : i32
    %1 = arith.extui %0 : i1 to i32
    %c0_i32_0 = arith.constant 0 : i32
    %2 = arith.cmpi ne, %1, %c0_i32_0 : i32
    scf.if %2 {
      %c0_101 = arith.constant 0 : index
      %c0_102 = arith.constant 0 : index
      %c0_103 = arith.constant 0 : index
      %227 = vector.load %arg2[%c0_101, %c0_102, %c0_103] : memref<1x8x32xf32, #tpu.memory_space<vmem>>, vector<1x8x32xf32>
      %c0_104 = arith.constant 0 : index
      %c0_105 = arith.constant 0 : index
      %c0_106 = arith.constant 0 : index
      %228 = vector.load %arg20[%c0_104, %c0_105, %c0_106] : memref<1x8x32xf32, #tpu.memory_space<vmem>>, vector<1x8x32xf32>
      tpu.vector_store %arg20[%c0_104, %c0_105, %c0_106], %227 {strides = array<i32>} : memref<1x8x32xf32, #tpu.memory_space<vmem>>, vector<1x8x32xf32>,
    } else {
    }
    %c0 = arith.constant 0 : index
    %c0_1 = arith.constant 0 : index
    %c0_2 = arith.constant 0 : index
    %3 = vector.load %arg20[%c0, %c0_1, %c0_2] : memref<1x8x32xf32, #tpu.memory_space<vmem>>, vector<1x8x32xf32>
    %4 = vector.shape_cast %3 : vector<1x8x32xf32> to vector<8x32xf32>
    %c0_3 = arith.constant 0 : index
    %c0_4 = arith.constant 0 : index
    %c0_5 = arith.constant 0 : index
    %5 = vector.load %arg8[%c0_3, %c0_4, %c0_5] : memref<1x1x32xf32, #tpu.memory_space<vmem>>, vector<1x1x32xf32>
    %6 = vector.shape_cast %5 : vector<1x1x32xf32> to vector<1x32xf32>
    %c0_6 = arith.constant 0 : index
    %c0_7 = arith.constant 0 : index
    %c0_8 = arith.constant 0 : index
    %7 = vector.load %arg9[%c0_6, %c0_7, %c0_8] : memref<1x1x32xf32, #tpu.memory_space<vmem>>, vector<1x1x32xf32>
    %8 = vector.shape_cast %7 : vector<1x1x32xf32> to vector<1x32xf32>
    %cst = arith.constant dense<0.000000e+00> : vector<8xf32>
    %9 = vector.multi_reduction <add>, %4, %cst [1] : vector<8x32xf32> to vector<8xf32>
    %10 = vector.shape_cast %9 : vector<8xf32> to vector<8x1xf32>
    %cst_9 = arith.constant 3.200000e+01 : f32
    %11 = vector.broadcast %cst_9 : f32 to vector<8x1xf32>
    %12 = arith.divf %10, %11 : vector<8x1xf32>
    %13 = vector.broadcast %12 : vector<8x1xf32> to vector<8x32xf32>
    %14 = arith.subf %4, %13 : vector<8x32xf32>
    %15 = arith.mulf %14, %14 : vector<8x32xf32>
    %cst_10 = arith.constant dense<0.000000e+00> : vector<8xf32>
    %16 = vector.multi_reduction <add>, %15, %cst_10 [1] : vector<8x32xf32> to vector<8xf32>
    %17 = vector.shape_cast %16 : vector<8xf32> to vector<8x1xf32>
    %cst_11 = arith.constant 3.200000e+01 : f32
    %18 = vector.broadcast %cst_11 : f32 to vector<8x1xf32>
    %19 = arith.divf %17, %18 : vector<8x1xf32>
    %20 = vector.broadcast %12 : vector<8x1xf32> to vector<8x32xf32>
    %21 = arith.subf %4, %20 : vector<8x32xf32>
    %cst_12 = arith.constant 9.99999974E-6 : f32
    %22 = vector.broadcast %cst_12 : f32 to vector<8x1xf32>
    %23 = arith.addf %19, %22 : vector<8x1xf32>
    %24 = math.rsqrt %23 : vector<8x1xf32>
    %25 = vector.broadcast %24 : vector<8x1xf32> to vector<8x32xf32>
    %26 = arith.mulf %21, %25 : vector<8x32xf32>
    %27 = vector.broadcast %6 : vector<1x32xf32> to vector<8x32xf32>
    %28 = arith.mulf %26, %27 : vector<8x32xf32>
    %29 = vector.broadcast %8 : vector<1x32xf32> to vector<8x32xf32>
    %30 = arith.addf %28, %29 : vector<8x32xf32>
    %31 = arith.truncf %30 : vector<8x32xf32> to vector<8x32xbf16>
    %c0_13 = arith.constant 0 : index
    %c0_14 = arith.constant 0 : index
    %c0_15 = arith.constant 0 : index
    %32 = vector.load %arg4[%c0_13, %c0_14, %c0_15] : memref<1x32x96xbf16, #tpu.memory_space<vmem>>, vector<1x32x96xbf16>
    %33 = vector.shape_cast %32 : vector<1x32x96xbf16> to vector<32x96xbf16>
    %cst_16 = arith.constant dense<0.000000e+00> : vector<8x96xf32>
    %34 = tpu.matmul %31, %33, %cst_16 {dimension_numbers = #tpu.dot_dimension_numbers<[1], [0], [0], [1], [0, 0, 1, 1], [], []>} : vector<8x32xbf16>, vector<32x96xbf16>, vector<8x96xf32> -> vector<8x96xf32>
    %c0_17 = arith.constant 0 : index
    %c0_18 = arith.constant 0 : index
    %c0_19 = arith.constant 0 : index
    %35 = vector.load %arg5[%c0_17, %c0_18, %c0_19] : memref<1x1x96xf32, #tpu.memory_space<vmem>>, vector<1x1x96xf32>
    %36 = vector.shape_cast %35 : vector<1x1x96xf32> to vector<1x96xf32>
    %37 = vector.broadcast %36 : vector<1x96xf32> to vector<8x96xf32>
    %38 = arith.addf %34, %37 : vector<8x96xf32>
    %c0_20 = arith.constant 0 : index
    %c0_21 = arith.constant 0 : index
    %c0_22 = arith.constant 0 : index
    %39 = vector.load %arg3[%c0_20, %c0_21, %c0_22] : memref<1x1x8xf32, #tpu.memory_space<vmem>>, vector<1x1x8xf32>
    %40 = vector.shape_cast %39 : vector<1x1x8xf32> to vector<1x8xf32>
    %cst_23 = arith.constant 0.000000e+00 : f32
    %41 = vector.broadcast %cst_23 : f32 to vector<8x32xf32>
    %42 = vector.extract_strided_slice %38 {offsets = [0, 0], sizes = [8, 16], strides = [1, 1]} : vector<8x96xf32> to vector<8x16xf32>
    %cst_24 = arith.constant 2.500000e-01 : f32
    %43 = vector.broadcast %cst_24 : f32 to vector<8x16xf32>
    %44 = arith.mulf %42, %43 : vector<8x16xf32>
    %45 = vector.extract_strided_slice %38 {offsets = [0, 32], sizes = [8, 16], strides = [1, 1]} : vector<8x96xf32> to vector<8x16xf32>
    %46 = vector.extract_strided_slice %38 {offsets = [0, 64], sizes = [8, 16], strides = [1, 1]} : vector<8x96xf32> to vector<8x16xf32>
    %cst_25 = arith.constant 0xFF800000 : f32
    %47 = vector.broadcast %cst_25 : f32 to vector<8x1xf32>
    %cst_26 = arith.constant 0.000000e+00 : f32
    %48 = vector.broadcast %cst_26 : f32 to vector<8x1xf32>
    %cst_27 = arith.constant 0.000000e+00 : f32
    %49 = vector.broadcast %cst_27 : f32 to vector<8x16xf32>
    %50 = arith.truncf %44 : vector<8x16xf32> to vector<8x16xbf16>
    %51 = arith.truncf %45 : vector<8x16xf32> to vector<8x16xbf16>
    %cst_28 = arith.constant dense<0.000000e+00> : vector<8x8xf32>
    %52 = tpu.matmul %50, %51, %cst_28 {dimension_numbers = #tpu.dot_dimension_numbers<[1], [1], [0], [0], [0, 0, 1, 0], [], []>} : vector<8x16xbf16>, vector<8x16xbf16>, vector<8x8xf32> -> vector<8x8xf32>
    %53 = vector.broadcast %40 : vector<1x8xf32> to vector<8x8xf32>
    %54 = arith.addf %52, %53 : vector<8x8xf32>
    %cst_29 = arith.constant dense<0xFF800000> : vector<8xf32>
    %55 = vector.multi_reduction <maximumf>, %54, %cst_29 [1] : vector<8x8xf32> to vector<8xf32>
    %56 = vector.shape_cast %55 : vector<8xf32> to vector<8x1xf32>
    %57 = arith.maximumf %47, %56 : vector<8x1xf32>
    %58 = arith.subf %47, %57 : vector<8x1xf32>
    %59 = math.exp %58 : vector<8x1xf32>
    %60 = vector.broadcast %57 : vector<8x1xf32> to vector<8x8xf32>
    %61 = arith.subf %54, %60 : vector<8x8xf32>
    %62 = math.exp %61 : vector<8x8xf32>
    %63 = arith.mulf %59, %48 : vector<8x1xf32>
    %cst_30 = arith.constant dense<0.000000e+00> : vector<8xf32>
    %64 = vector.multi_reduction <add>, %62, %cst_30 [1] : vector<8x8xf32> to vector<8xf32>
    %65 = vector.shape_cast %64 : vector<8xf32> to vector<8x1xf32>
    %66 = arith.addf %63, %65 : vector<8x1xf32>
    %67 = vector.broadcast %59 : vector<8x1xf32> to vector<8x16xf32>
    %68 = arith.mulf %67, %49 : vector<8x16xf32>
    %69 = arith.truncf %62 : vector<8x8xf32> to vector<8x8xbf16>
    %70 = arith.truncf %46 : vector<8x16xf32> to vector<8x16xbf16>
    %cst_31 = arith.constant dense<0.000000e+00> : vector<8x16xf32>
    %71 = tpu.matmul %69, %70, %cst_31 {dimension_numbers = #tpu.dot_dimension_numbers<[1], [0], [0], [1], [0, 0, 1, 1], [], []>} : vector<8x8xbf16>, vector<8x16xbf16>, vector<8x16xf32> -> vector<8x16xf32>
    %72 = arith.addf %68, %71 : vector<8x16xf32>
    %73 = tpu.reciprocal %66 {approx = true} : vector<8x1xf32> -> vector<8x1xf32>
    %74 = vector.broadcast %73 : vector<8x1xf32> to vector<8x16xf32>
    %75 = arith.mulf %72, %74 : vector<8x16xf32>
    %76 = arith.truncf %75 : vector<8x16xf32> to vector<8x16xbf16>
    %c0_32 = arith.constant 0 : index
    %c0_33 = arith.constant 0 : index
    %c0_34 = arith.constant 0 : index
    %c0_35 = arith.constant 0 : index
    %77 = vector.load %arg6[%c0_32, %c0_33, %c0_34, %c0_35] : memref<1x2x16x32xbf16, #tpu.memory_space<vmem>>, vector<1x1x16x32xbf16>
    %78 = vector.shape_cast %77 : vector<1x1x16x32xbf16> to vector<16x32xbf16>
    %cst_36 = arith.constant dense<0.000000e+00> : vector<8x32xf32>
    %79 = tpu.matmul %76, %78, %cst_36 {dimension_numbers = #tpu.dot_dimension_numbers<[1], [0], [0], [1], [0, 0, 1, 1], [], []>} : vector<8x16xbf16>, vector<16x32xbf16>, vector<8x32xf32> -> vector<8x32xf32>
    %80 = arith.addf %41, %79 : vector<8x32xf32>
    %81 = vector.extract_strided_slice %38 {offsets = [0, 16], sizes = [8, 16], strides = [1, 1]} : vector<8x96xf32> to vector<8x16xf32>
    %cst_37 = arith.constant 2.500000e-01 : f32
    %82 = vector.broadcast %cst_37 : f32 to vector<8x16xf32>
    %83 = arith.mulf %81, %82 : vector<8x16xf32>
    %84 = vector.extract_strided_slice %38 {offsets = [0, 48], sizes = [8, 16], strides = [1, 1]} : vector<8x96xf32> to vector<8x16xf32>
    %85 = vector.extract_strided_slice %38 {offsets = [0, 80], sizes = [8, 16], strides = [1, 1]} : vector<8x96xf32> to vector<8x16xf32>
    %cst_38 = arith.constant 0xFF800000 : f32
    %86 = vector.broadcast %cst_38 : f32 to vector<8x1xf32>
    %cst_39 = arith.constant 0.000000e+00 : f32
    %87 = vector.broadcast %cst_39 : f32 to vector<8x1xf32>
    %cst_40 = arith.constant 0.000000e+00 : f32
    %88 = vector.broadcast %cst_40 : f32 to vector<8x16xf32>
    %89 = arith.truncf %83 : vector<8x16xf32> to vector<8x16xbf16>
    %90 = arith.truncf %84 : vector<8x16xf32> to vector<8x16xbf16>
    %cst_41 = arith.constant dense<0.000000e+00> : vector<8x8xf32>
    %91 = tpu.matmul %89, %90, %cst_41 {dimension_numbers = #tpu.dot_dimension_numbers<[1], [1], [0], [0], [0, 0, 1, 0], [], []>} : vector<8x16xbf16>, vector<8x16xbf16>, vector<8x8xf32> -> vector<8x8xf32>
    %92 = vector.broadcast %40 : vector<1x8xf32> to vector<8x8xf32>
    %93 = arith.addf %91, %92 : vector<8x8xf32>
    %cst_42 = arith.constant dense<0xFF800000> : vector<8xf32>
    %94 = vector.multi_reduction <maximumf>, %93, %cst_42 [1] : vector<8x8xf32> to vector<8xf32>
    %95 = vector.shape_cast %94 : vector<8xf32> to vector<8x1xf32>
    %96 = arith.maximumf %86, %95 : vector<8x1xf32>
    %97 = arith.subf %86, %96 : vector<8x1xf32>
    %98 = math.exp %97 : vector<8x1xf32>
    %99 = vector.broadcast %96 : vector<8x1xf32> to vector<8x8xf32>
    %100 = arith.subf %93, %99 : vector<8x8xf32>
    %101 = math.exp %100 : vector<8x8xf32>
    %102 = arith.mulf %98, %87 : vector<8x1xf32>
    %cst_43 = arith.constant dense<0.000000e+00> : vector<8xf32>
    %103 = vector.multi_reduction <add>, %101, %cst_43 [1] : vector<8x8xf32> to vector<8xf32>
    %104 = vector.shape_cast %103 : vector<8xf32> to vector<8x1xf32>
    %105 = arith.addf %102, %104 : vector<8x1xf32>
    %106 = vector.broadcast %98 : vector<8x1xf32> to vector<8x16xf32>
    %107 = arith.mulf %106, %88 : vector<8x16xf32>
    %108 = arith.truncf %101 : vector<8x8xf32> to vector<8x8xbf16>
    %109 = arith.truncf %85 : vector<8x16xf32> to vector<8x16xbf16>
    %cst_44 = arith.constant dense<0.000000e+00> : vector<8x16xf32>
    %110 = tpu.matmul %108, %109, %cst_44 {dimension_numbers = #tpu.dot_dimension_numbers<[1], [0], [0], [1], [0, 0, 1, 1], [], []>} : vector<8x8xbf16>, vector<8x16xbf16>, vector<8x16xf32> -> vector<8x16xf32>
    %111 = arith.addf %107, %110 : vector<8x16xf32>
    %112 = tpu.reciprocal %105 {approx = true} : vector<8x1xf32> -> vector<8x1xf32>
    %113 = vector.broadcast %112 : vector<8x1xf32> to vector<8x16xf32>
    %114 = arith.mulf %111, %113 : vector<8x16xf32>
    %115 = arith.truncf %114 : vector<8x16xf32> to vector<8x16xbf16>
    %c0_45 = arith.constant 0 : index
    %c1 = arith.constant 1 : index
    %c0_46 = arith.constant 0 : index
    %c0_47 = arith.constant 0 : index
    %116 = vector.load %arg6[%c0_45, %c1, %c0_46, %c0_47] : memref<1x2x16x32xbf16, #tpu.memory_space<vmem>>, vector<1x1x16x32xbf16>
    %117 = vector.shape_cast %116 : vector<1x1x16x32xbf16> to vector<16x32xbf16>
    %cst_48 = arith.constant dense<0.000000e+00> : vector<8x32xf32>
    %118 = tpu.matmul %115, %117, %cst_48 {dimension_numbers = #tpu.dot_dimension_numbers<[1], [0], [0], [1], [0, 0, 1, 1], [], []>} : vector<8x16xbf16>, vector<16x32xbf16>, vector<8x32xf32> -> vector<8x32xf32>
    %119 = arith.addf %80, %118 : vector<8x32xf32>
    %c0_49 = arith.constant 0 : index
    %c0_50 = arith.constant 0 : index
    %c0_51 = arith.constant 0 : index
    %120 = vector.load %arg7[%c0_49, %c0_50, %c0_51] : memref<1x1x32xf32, #tpu.memory_space<vmem>>, vector<1x1x32xf32>
    %121 = vector.shape_cast %120 : vector<1x1x32xf32> to vector<1x32xf32>
    %122 = vector.broadcast %121 : vector<1x32xf32> to vector<8x32xf32>
    %123 = arith.addf %119, %122 : vector<8x32xf32>
    %124 = arith.addf %123, %4 : vector<8x32xf32>
    %c0_52 = arith.constant 0 : index
    %c0_53 = arith.constant 0 : index
    %125 = vector.load %arg16[%c0_52, %c0_53] : memref<1x32xf32, #tpu.memory_space<vmem>>, vector<1x32xf32>
    %c0_54 = arith.constant 0 : index
    %c0_55 = arith.constant 0 : index
    %126 = vector.load %arg17[%c0_54, %c0_55] : memref<1x32xf32, #tpu.memory_space<vmem>>, vector<1x32xf32>
    %cst_56 = arith.constant dense<0.000000e+00> : vector<8xf32>
    %127 = vector.multi_reduction <add>, %124, %cst_56 [1] : vector<8x32xf32> to vector<8xf32>
    %128 = vector.shape_cast %127 : vector<8xf32> to vector<8x1xf32>
    %cst_57 = arith.constant 3.200000e+01 : f32
    %129 = vector.broadcast %cst_57 : f32 to vector<8x1xf32>
    %130 = arith.divf %128, %129 : vector<8x1xf32>
    %131 = vector.broadcast %130 : vector<8x1xf32> to vector<8x32xf32>
    %132 = arith.subf %124, %131 : vector<8x32xf32>
    %133 = arith.mulf %132, %132 : vector<8x32xf32>
    %cst_58 = arith.constant dense<0.000000e+00> : vector<8xf32>
    %134 = vector.multi_reduction <add>, %133, %cst_58 [1] : vector<8x32xf32> to vector<8xf32>
    %135 = vector.shape_cast %134 : vector<8xf32> to vector<8x1xf32>
    %cst_59 = arith.constant 3.200000e+01 : f32
    %136 = vector.broadcast %cst_59 : f32 to vector<8x1xf32>
    %137 = arith.divf %135, %136 : vector<8x1xf32>
    %138 = vector.broadcast %130 : vector<8x1xf32> to vector<8x32xf32>
    %139 = arith.subf %124, %138 : vector<8x32xf32>
    %cst_60 = arith.constant 9.99999974E-6 : f32
    %140 = vector.broadcast %cst_60 : f32 to vector<8x1xf32>
    %141 = arith.addf %137, %140 : vector<8x1xf32>
    %142 = math.rsqrt %141 : vector<8x1xf32>
    %143 = vector.broadcast %142 : vector<8x1xf32> to vector<8x32xf32>
    %144 = arith.mulf %139, %143 : vector<8x32xf32>
    %145 = vector.broadcast %125 : vector<1x32xf32> to vector<8x32xf32>
    %146 = arith.mulf %144, %145 : vector<8x32xf32>
    %147 = vector.broadcast %126 : vector<1x32xf32> to vector<8x32xf32>
    %148 = arith.addf %146, %147 : vector<8x32xf32>
    %c0_61 = arith.constant 0 : index
    %c0_62 = arith.constant 0 : index
    %c0_63 = arith.constant 0 : index
    %149 = vector.load %arg10[%c0_61, %c0_62, %c0_63] : memref<1x1x32xf32, #tpu.memory_space<vmem>>, vector<1x1x32xf32>
    %150 = vector.shape_cast %149 : vector<1x1x32xf32> to vector<1x32xf32>
    %c0_64 = arith.constant 0 : index
    %c0_65 = arith.constant 0 : index
    %c0_66 = arith.constant 0 : index
    %151 = vector.load %arg11[%c0_64, %c0_65, %c0_66] : memref<1x1x32xf32, #tpu.memory_space<vmem>>, vector<1x1x32xf32>
    %152 = vector.shape_cast %151 : vector<1x1x32xf32> to vector<1x32xf32>
    %cst_67 = arith.constant dense<0.000000e+00> : vector<8xf32>
    %153 = vector.multi_reduction <add>, %148, %cst_67 [1] : vector<8x32xf32> to vector<8xf32>
    %154 = vector.shape_cast %153 : vector<8xf32> to vector<8x1xf32>
    %cst_68 = arith.constant 3.200000e+01 : f32
    %155 = vector.broadcast %cst_68 : f32 to vector<8x1xf32>
    %156 = arith.divf %154, %155 : vector<8x1xf32>
    %157 = vector.broadcast %156 : vector<8x1xf32> to vector<8x32xf32>
    %158 = arith.subf %148, %157 : vector<8x32xf32>
    %159 = arith.mulf %158, %158 : vector<8x32xf32>
    %cst_69 = arith.constant dense<0.000000e+00> : vector<8xf32>
    %160 = vector.multi_reduction <add>, %159, %cst_69 [1] : vector<8x32xf32> to vector<8xf32>
    %161 = vector.shape_cast %160 : vector<8xf32> to vector<8x1xf32>
    %cst_70 = arith.constant 3.200000e+01 : f32
    %162 = vector.broadcast %cst_70 : f32 to vector<8x1xf32>
    %163 = arith.divf %161, %162 : vector<8x1xf32>
    %164 = vector.broadcast %156 : vector<8x1xf32> to vector<8x32xf32>
    %165 = arith.subf %148, %164 : vector<8x32xf32>
    %cst_71 = arith.constant 9.99999974E-6 : f32
    %166 = vector.broadcast %cst_71 : f32 to vector<8x1xf32>
    %167 = arith.addf %163, %166 : vector<8x1xf32>
    %168 = math.rsqrt %167 : vector<8x1xf32>
    %169 = vector.broadcast %168 : vector<8x1xf32> to vector<8x32xf32>
    %170 = arith.mulf %165, %169 : vector<8x32xf32>
    %171 = vector.broadcast %150 : vector<1x32xf32> to vector<8x32xf32>
    %172 = arith.mulf %170, %171 : vector<8x32xf32>
    %173 = vector.broadcast %152 : vector<1x32xf32> to vector<8x32xf32>
    %174 = arith.addf %172, %173 : vector<8x32xf32>
    %175 = arith.truncf %174 : vector<8x32xf32> to vector<8x32xbf16>
    %c0_72 = arith.constant 0 : index
    %c0_73 = arith.constant 0 : index
    %c0_74 = arith.constant 0 : index
    %176 = vector.load %arg12[%c0_72, %c0_73, %c0_74] : memref<1x32x64xbf16, #tpu.memory_space<vmem>>, vector<1x32x64xbf16>
    %177 = vector.shape_cast %176 : vector<1x32x64xbf16> to vector<32x64xbf16>
    %cst_75 = arith.constant dense<0.000000e+00> : vector<8x64xf32>
    %178 = tpu.matmul %175, %177, %cst_75 {dimension_numbers = #tpu.dot_dimension_numbers<[1], [0], [0], [1], [0, 0, 1, 1], [], []>} : vector<8x32xbf16>, vector<32x64xbf16>, vector<8x64xf32> -> vector<8x64xf32>
    %c0_76 = arith.constant 0 : index
    %c0_77 = arith.constant 0 : index
    %c0_78 = arith.constant 0 : index
    %179 = vector.load %arg13[%c0_76, %c0_77, %c0_78] : memref<1x1x64xf32, #tpu.memory_space<vmem>>, vector<1x1x64xf32>
    %180 = vector.shape_cast %179 : vector<1x1x64xf32> to vector<1x64xf32>
    %181 = vector.broadcast %180 : vector<1x64xf32> to vector<8x64xf32>
    %182 = arith.addf %178, %181 : vector<8x64xf32>
    %cst_79 = arith.constant 5.000000e-01 : f32
    %183 = vector.broadcast %cst_79 : f32 to vector<8x64xf32>
    %184 = arith.mulf %183, %182 : vector<8x64xf32>
    %cst_80 = arith.constant 0.707106769 : f32
    %185 = vector.broadcast %cst_80 : f32 to vector<8x64xf32>
    %186 = arith.mulf %182, %185 : vector<8x64xf32>
    %187 = math.erf %186 : vector<8x64xf32>
    %cst_81 = arith.constant 1.000000e+00 : f32
    %188 = vector.broadcast %cst_81 : f32 to vector<8x64xf32>
    %189 = arith.addf %188, %187 : vector<8x64xf32>
    %190 = arith.mulf %184, %189 : vector<8x64xf32>
    %191 = arith.truncf %190 : vector<8x64xf32> to vector<8x64xbf16>
    %c0_82 = arith.constant 0 : index
    %c0_83 = arith.constant 0 : index
    %c0_84 = arith.constant 0 : index
    %192 = vector.load %arg14[%c0_82, %c0_83, %c0_84] : memref<1x64x32xbf16, #tpu.memory_space<vmem>>, vector<1x64x32xbf16>
    %193 = vector.shape_cast %192 : vector<1x64x32xbf16> to vector<64x32xbf16>
    %cst_85 = arith.constant dense<0.000000e+00> : vector<8x32xf32>
    %194 = tpu.matmul %191, %193, %cst_85 {dimension_numbers = #tpu.dot_dimension_numbers<[1], [0], [0], [1], [0, 0, 1, 1], [], []>} : vector<8x64xbf16>, vector<64x32xbf16>, vector<8x32xf32> -> vector<8x32xf32>
    %c0_86 = arith.constant 0 : index
    %c0_87 = arith.constant 0 : index
    %c0_88 = arith.constant 0 : index
    %195 = vector.load %arg15[%c0_86, %c0_87, %c0_88] : memref<1x1x32xf32, #tpu.memory_space<vmem>>, vector<1x1x32xf32>
    %196 = vector.shape_cast %195 : vector<1x1x32xf32> to vector<1x32xf32>
    %197 = vector.broadcast %196 : vector<1x32xf32> to vector<8x32xf32>
    %198 = arith.addf %194, %197 : vector<8x32xf32>
    %199 = arith.addf %198, %148 : vector<8x32xf32>
    %c0_89 = arith.constant 0 : index
    %c0_90 = arith.constant 0 : index
    %200 = vector.load %arg18[%c0_89, %c0_90] : memref<1x32xf32, #tpu.memory_space<vmem>>, vector<1x32xf32>
    %c0_91 = arith.constant 0 : index
    %c0_92 = arith.constant 0 : index
    %201 = vector.load %arg19[%c0_91, %c0_92] : memref<1x32xf32, #tpu.memory_space<vmem>>, vector<1x32xf32>
    %cst_93 = arith.constant dense<0.000000e+00> : vector<8xf32>
    %202 = vector.multi_reduction <add>, %199, %cst_93 [1] : vector<8x32xf32> to vector<8xf32>
    %203 = vector.shape_cast %202 : vector<8xf32> to vector<8x1xf32>
    %cst_94 = arith.constant 3.200000e+01 : f32
    %204 = vector.broadcast %cst_94 : f32 to vector<8x1xf32>
    %205 = arith.divf %203, %204 : vector<8x1xf32>
    %206 = vector.broadcast %205 : vector<8x1xf32> to vector<8x32xf32>
    %207 = arith.subf %199, %206 : vector<8x32xf32>
    %208 = arith.mulf %207, %207 : vector<8x32xf32>
    %cst_95 = arith.constant dense<0.000000e+00> : vector<8xf32>
    %209 = vector.multi_reduction <add>, %208, %cst_95 [1] : vector<8x32xf32> to vector<8xf32>
    %210 = vector.shape_cast %209 : vector<8xf32> to vector<8x1xf32>
    %cst_96 = arith.constant 3.200000e+01 : f32
    %211 = vector.broadcast %cst_96 : f32 to vector<8x1xf32>
    %212 = arith.divf %210, %211 : vector<8x1xf32>
    %213 = vector.broadcast %205 : vector<8x1xf32> to vector<8x32xf32>
    %214 = arith.subf %199, %213 : vector<8x32xf32>
    %cst_97 = arith.constant 9.99999974E-6 : f32
    %215 = vector.broadcast %cst_97 : f32 to vector<8x1xf32>
    %216 = arith.addf %212, %215 : vector<8x1xf32>
    %217 = math.rsqrt %216 : vector<8x1xf32>
    %218 = vector.broadcast %217 : vector<8x1xf32> to vector<8x32xf32>
    %219 = arith.mulf %214, %218 : vector<8x32xf32>
    %220 = vector.broadcast %200 : vector<1x32xf32> to vector<8x32xf32>
    %221 = arith.mulf %219, %220 : vector<8x32xf32>
    %222 = vector.broadcast %201 : vector<1x32xf32> to vector<8x32xf32>
    %223 = arith.addf %221, %222 : vector<8x32xf32>
    %c0_98 = arith.constant 0 : index
    %c0_99 = arith.constant 0 : index
    %c0_100 = arith.constant 0 : index
    %224 = vector.load %arg20[%c0_98, %c0_99, %c0_100] : memref<1x8x32xf32, #tpu.memory_space<vmem>>, vector<1x8x32xf32>
    %225 = vector.shape_cast %224 : vector<1x8x32xf32> to vector<8x32xf32>
    %226 = vector.shape_cast %223 : vector<8x32xf32> to vector<1x8x32xf32>
    tpu.vector_store %arg20[%c0_98, %c0_99, %c0_100], %226 {strides = array<i32>} : memref<1x8x32xf32, #tpu.memory_space<vmem>>, vector<1x8x32xf32>,
    return
  }
  func.func @transform_0(%arg0: i32, %arg1: i32) -> (i32, i32, i32) {
    %c0_i32 = arith.constant 0 : i32
    %c0_i32_0 = arith.constant 0 : i32
    %c0_i32_1 = arith.constant 0 : i32
    return %arg0, %c0_i32, %c0_i32_0 : i32, i32, i32
  }
  func.func @transform_1(%arg0: i32, %arg1: i32) -> (i32, i32, i32) {
    %c0_i32 = arith.constant 0 : i32
    %c0_i32_0 = arith.constant 0 : i32
    %c0_i32_1 = arith.constant 0 : i32
    return %arg0, %c0_i32, %c0_i32_0 : i32, i32, i32
  }
  func.func @transform_2(%arg0: i32, %arg1: i32) -> (i32, i32, i32) {
    %c0_i32 = arith.constant 0 : i32
    %c0_i32_0 = arith.constant 0 : i32
    %c0_i32_1 = arith.constant 0 : i32
    return %arg1, %c0_i32, %c0_i32_0 : i32, i32, i32
  }
  func.func @transform_3(%arg0: i32, %arg1: i32) -> (i32, i32, i32) {
    %c0_i32 = arith.constant 0 : i32
    %c0_i32_0 = arith.constant 0 : i32
    %c0_i32_1 = arith.constant 0 : i32
    return %arg1, %c0_i32, %c0_i32_0 : i32, i32, i32
  }
  func.func @transform_4(%arg0: i32, %arg1: i32) -> (i32, i32, i32, i32) {
    %c0_i32 = arith.constant 0 : i32
    %c0_i32_0 = arith.constant 0 : i32
    %c0_i32_1 = arith.constant 0 : i32
    %c0_i32_2 = arith.constant 0 : i32
    return %arg1, %c0_i32, %c0_i32_0, %c0_i32_1 : i32, i32, i32, i32
  }
  func.func @transform_5(%arg0: i32, %arg1: i32) -> (i32, i32, i32) {
    %c0_i32 = arith.constant 0 : i32
    %c0_i32_0 = arith.constant 0 : i32
    %c0_i32_1 = arith.constant 0 : i32
    return %arg1, %c0_i32, %c0_i32_0 : i32, i32, i32
  }
  func.func @transform_6(%arg0: i32, %arg1: i32) -> (i32, i32, i32) {
    %c0_i32 = arith.constant 0 : i32
    %c0_i32_0 = arith.constant 0 : i32
    %c0_i32_1 = arith.constant 0 : i32
    return %arg1, %c0_i32, %c0_i32_0 : i32, i32, i32
  }
  func.func @transform_7(%arg0: i32, %arg1: i32) -> (i32, i32, i32) {
    %c0_i32 = arith.constant 0 : i32
    %c0_i32_0 = arith.constant 0 : i32
    %c0_i32_1 = arith.constant 0 : i32
    return %arg1, %c0_i32, %c0_i32_0 : i32, i32, i32
  }
  func.func @transform_8(%arg0: i32, %arg1: i32) -> (i32, i32, i32) {
    %c0_i32 = arith.constant 0 : i32
    %c0_i32_0 = arith.constant 0 : i32
    %c0_i32_1 = arith.constant 0 : i32
    return %arg1, %c0_i32, %c0_i32_0 : i32, i32, i32
  }
  func.func @transform_9(%arg0: i32, %arg1: i32) -> (i32, i32, i32) {
    %c0_i32 = arith.constant 0 : i32
    %c0_i32_0 = arith.constant 0 : i32
    %c0_i32_1 = arith.constant 0 : i32
    return %arg1, %c0_i32, %c0_i32_0 : i32, i32, i32
  }
  func.func @transform_10(%arg0: i32, %arg1: i32) -> (i32, i32, i32) {
    %c0_i32 = arith.constant 0 : i32
    %c0_i32_0 = arith.constant 0 : i32
    %c0_i32_1 = arith.constant 0 : i32
    return %arg1, %c0_i32, %c0_i32_0 : i32, i32, i32
  }
  func.func @transform_11(%arg0: i32, %arg1: i32) -> (i32, i32, i32) {
    %c0_i32 = arith.constant 0 : i32
    %c0_i32_0 = arith.constant 0 : i32
    %c0_i32_1 = arith.constant 0 : i32
    return %arg1, %c0_i32, %c0_i32_0 : i32, i32, i32
  }
  func.func @transform_12(%arg0: i32, %arg1: i32) -> (i32, i32, i32) {
    %c0_i32 = arith.constant 0 : i32
    %c0_i32_0 = arith.constant 0 : i32
    %c0_i32_1 = arith.constant 0 : i32
    return %arg1, %c0_i32, %c0_i32_0 : i32, i32, i32
  }
  func.func @transform_13(%arg0: i32, %arg1: i32) -> (i32, i32, i32) {
    %c0_i32 = arith.constant 0 : i32
    %c0_i32_0 = arith.constant 0 : i32
    %c0_i32_1 = arith.constant 0 : i32
    return %arg1, %c0_i32, %c0_i32_0 : i32, i32, i32
  }
  func.func @transform_14(%arg0: i32, %arg1: i32) -> (i32, i32) {
    %c0_i32 = arith.constant 0 : i32
    %c0_i32_0 = arith.constant 0 : i32
    %c0_i32_1 = arith.constant 0 : i32
    return %c0_i32, %c0_i32_0 : i32, i32
  }
  func.func @transform_15(%arg0: i32, %arg1: i32) -> (i32, i32) {
    %c0_i32 = arith.constant 0 : i32
    %c0_i32_0 = arith.constant 0 : i32
    %c0_i32_1 = arith.constant 0 : i32
    return %c0_i32, %c0_i32_0 : i32, i32
  }
  func.func @transform_16(%arg0: i32, %arg1: i32) -> (i32, i32) {
    %c0_i32 = arith.constant 0 : i32
    %c0_i32_0 = arith.constant 0 : i32
    %c0_i32_1 = arith.constant 0 : i32
    return %c0_i32, %c0_i32_0 : i32, i32
  }
  func.func @transform_17(%arg0: i32, %arg1: i32) -> (i32, i32) {
    %c0_i32 = arith.constant 0 : i32
    %c0_i32_0 = arith.constant 0 : i32
    %c0_i32_1 = arith.constant 0 : i32
    return %c0_i32, %c0_i32_0 : i32, i32
  }
  func.func @transform_18(%arg0: i32, %arg1: i32) -> (i32, i32, i32) {
    %c0_i32 = arith.constant 0 : i32
    %c0_i32_0 = arith.constant 0 : i32
    %c0_i32_1 = arith.constant 0 : i32
    return %arg0, %c0_i32, %c0_i32_0 : i32, i32, i32
  }
}

</mosaic_0001>

<llo_original>
// kernel: tpu_custom_call.1
$region0: #{tpu_custom_call.1}
  #allocation0 [shape = 'u32[]', space=smem, size = 0x4, offset = 0x4, fixed_abs, tag = 'smem constant byte address 0x4 - core index']
  #allocation1 [shape = 'u32[144,128]{1,0:T(1,128)}', space=vmem, size = 0x12000, scoped, tag = 'internal scratch']
  %s0 = inlined_call_operand.hbm [shape: f32[2,8,32], index: 0, kind: input, shape index: {}]
  %s1 = inlined_call_operand.hbm [shape: f32[2,1,8], index: 1, kind: input, shape index: {}]
  %s2 = inlined_call_operand.vmem [shape: bf16[2,32,96], index: 2, kind: input, shape index: {}]
  %s3 = inlined_call_operand.vmem [shape: f32[2,1,96], index: 3, kind: input, shape index: {}]
  %s4 = inlined_call_operand.vmem [shape: bf16[2,2,16,32], index: 4, kind: input, shape index: {}]
  %s5 = inlined_call_operand.vmem [shape: f32[2,1,32], index: 5, kind: input, shape index: {}]
  %s6 = inlined_call_operand.vmem [shape: f32[2,1,32], index: 6, kind: input, shape index: {}]
  %s7 = inlined_call_operand.vmem [shape: f32[2,1,32], index: 7, kind: input, shape index: {}]
  %s8 = inlined_call_operand.vmem [shape: f32[2,1,32], index: 8, kind: input, shape index: {}]
  %s9 = inlined_call_operand.vmem [shape: f32[2,1,32], index: 9, kind: input, shape index: {}]
  %s10 = inlined_call_operand.vmem [shape: bf16[2,32,64], index: 10, kind: input, shape index: {}]
  %s11 = inlined_call_operand.vmem [shape: f32[2,1,64], index: 11, kind: input, shape index: {}]
  %s12 = inlined_call_operand.vmem [shape: bf16[2,64,32], index: 12, kind: input, shape index: {}]
  %s13 = inlined_call_operand.vmem [shape: f32[2,1,32], index: 13, kind: input, shape index: {}]
  %s14 = inlined_call_operand.vmem [shape: f32[1,32], index: 14, kind: input, shape index: {}]
  %s15 = inlined_call_operand.vmem [shape: f32[1,32], index: 15, kind: input, shape index: {}]
  %s16 = inlined_call_operand.vmem [shape: f32[1,32], index: 16, kind: input, shape index: {}]
  %s17 = inlined_call_operand.vmem [shape: f32[1,32], index: 17, kind: input, shape index: {}]
  %s18 = inlined_call_operand.hbm [shape: f32[2,8,32], index: 18, kind: output, shape index: {}]
  %s19 = sld [smem:[#allocation0]]
  $region117: #{tpu_custom_call.1} parent=0
    _
  %s21 = ssub.s32 1, %s19
  %s22 = scalar_select 0, %s21, %s19
  $region1: #{tpu_custom_call.1} parent=0
    #allocation2 [shape = 'u8[8192]{0}', space=vmem, size = 0x2000, scoped, tag = 'input window, operand 0']
    #allocation3 [shape = 's32[2]{0}', space=sflag, size = 0x8, scoped, tag = 'scoped memory for tpu_custom_call.1']
    #allocation4 [shape = 's32[2]{0}', space=sflag, size = 0x8, scoped, tag = 'scoped memory for tpu_custom_call.1']
    #allocation5 [shape = 'u8[1024]{0}', space=vmem, size = 0x400, scoped, tag = 'input window, operand 1']
    #allocation6 [shape = 's32[2]{0}', space=sflag, size = 0x8, scoped, tag = 'scoped memory for tpu_custom_call.1']
    #allocation7 [shape = 'u8[8192]{0}', space=vmem, size = 0x2000, scoped, tag = 'output window, operand 0']
    %23 = vsyncpa [#allocation3], 0
    %s24 = scalar_lea.sflag [#allocation3], 1
    %25 = vsyncpa %s24, 0
    %26 = vsyncpa [#allocation6], 0
    %s27 = scalar_lea.sflag [#allocation6], 1
    %28 = vsyncpa %s27, 0
    %29 = vsyncpa [#allocation4], 0
    %s30 = scalar_lea.sflag [#allocation4], 1
    %31 = vsyncpa %s30, 0
    loop: start=0, step=1, limit=6
    $region2: #{tpu_custom_call.1} parent=1 // loop_pre_header
      _
    $region3: #{tpu_custom_call.1} parent=1 // loop_header
      %s33 = sphi 0, %s37
      %p34 = scmp.ge.s32.totalorder %s33, 6
      %s40 = sphi 0, %s52
      %s41 = sphi 0, %s48
      %s42 = sphi 0, %s40
      %s43 = sphi 0, %s41
      %s44 = sphi 0, %s42
      %s45 = sphi 0, %s43
      %s55 = sphi 0, %s57
      %s58 = sphi 0, %s55
      %s59 = sphi 0, %s58
      %s75 = sphi 0, %s59
      %s81 = sphi 0, %s83
      %s84 = sphi 0, %s81
      %s85 = sphi 0, %s84
      %s101 = sphi 0, %s85
      %s107 = sphi 0, %s109
      %s110 = sphi 0, %s107
      %s111 = sphi 0, %s110
      %s127 = sphi 0, %s111
      %s133 = sphi 0, %s135
      %s136 = sphi 0, %s133
      %s137 = sphi 0, %s136
      %s153 = sphi 0, %s137
      %s159 = sphi 0, %s161
      %s162 = sphi 0, %s159
      %s163 = sphi 0, %s162
      %s179 = sphi 0, %s163
      %s185 = sphi 0, %s187
      %s188 = sphi 0, %s185
      %s189 = sphi 0, %s188
      %s205 = sphi 0, %s189
      %s211 = sphi 0, %s213
      %s214 = sphi 0, %s211
      %s215 = sphi 0, %s214
      %s231 = sphi 0, %s215
      %s237 = sphi 0, %s239
      %s240 = sphi 0, %s237
      %s241 = sphi 0, %s240
      %s257 = sphi 0, %s241
      %s263 = sphi 0, %s265
      %s266 = sphi 0, %s263
      %s267 = sphi 0, %s266
      %s283 = sphi 0, %s267
      %s289 = sphi 0, %s291
      %s292 = sphi 0, %s289
      %s293 = sphi 0, %s292
      %s309 = sphi 0, %s293
      %s315 = sphi 0, %s317
      %s318 = sphi 0, %s315
      %s319 = sphi 0, %s318
      %s335 = sphi 0, %s319
      %s341 = sphi 0, %s343
      %s344 = sphi 0, %s341
      %s345 = sphi 0, %s344
      %s361 = sphi 0, %s345
      %s367 = sphi 0, %s369
      %s370 = sphi 0, %s367
      %s371 = sphi 0, %s370
      %s387 = sphi 0, %s371
      %s393 = sphi 0, %s395
      %s396 = sphi 0, %s393
      %s397 = sphi 0, %s396
      %s413 = sphi 0, %s397
      %s417 = sphi 0, %s417
      %s419 = sphi 0, %s417
      %s420 = sphi 0, %s419
      %s434 = sphi 0, %s420
      %s438 = sphi 0, %s438
      %s440 = sphi 0, %s438
      %s441 = sphi 0, %s440
      %s455 = sphi 0, %s441
      %s459 = sphi 0, %s459
      %s461 = sphi 0, %s459
      %s462 = sphi 0, %s461
      %s476 = sphi 0, %s462
      %s480 = sphi 0, %s480
      %s482 = sphi 0, %s480
      %s483 = sphi 0, %s482
      %s497 = sphi 0, %s483
      %s503 = sphi 0, %s505
      %s506 = sphi 0, %s503
      %s507 = sphi 0, %s506
      %s523 = sphi 0, %s507
    $region4: #{tpu_custom_call.1} parent=1 // loop_header_branch
      %36 = sbr.rel (%p34) target = $region8
    $region5: #{tpu_custom_call.1} parent=1 // loop_body
      %s38 = ssub.s32 %s33, 1
      %s39 = ssub.s32 %s33, 2
      %s46 = sadd.s32 1, %s41
      %p47 = scmp.ge.s32.totalorder %s46, 2
      %s48 = scalar_select %p47, 0, %s46
      %s49 = sadd.s32 1, %s40
      %s50 = scalar_select %p47, %s49, %s40
      %p51 = scmp.ge.s32.totalorder %s50, 2
      %s52 = scalar_select %p51, 0, %s50
      %s53 = ssub.s32 %s40, %s52
      %p54 = scmp.eq.s32.totalorder %s53, 0
      %s56 = sadd.s32 %s55, 1
      %s57 = scalar_select %p54, %s55, %s56
      %p60 = pneg %p54
      %p61 = scmp.eq.s32.totalorder %s33, 3
      %p62 = por %p60, %p61
      %p63 = scmp.ne.s32.totalorder %s55, %s58
      %p64 = scmp.eq.s32.totalorder %s33, 0
      %p65 = por %p63, %p64
      %p66 = scmp.ne.s32.totalorder %s55, %s58
      %p67 = scmp.eq.s32.totalorder %s38, 3
      %p68 = por %p66, %p67
      %p69 = scmp.ne.s32.totalorder %s58, %s59
      %p70 = scmp.eq.s32.totalorder %s38, 0
      %p71 = por %p69, %p70
      %p72 = scmp.ne.s32.totalorder %s58, %s59
      %p73 = scmp.eq.s32.totalorder %s39, 3
      %p74 = por %p72, %p73
      %p76 = scmp.ne.s32.totalorder %s59, %s75
      %p77 = scmp.eq.s32.totalorder %s39, 0
      %p78 = por %p76, %p77
      %s79 = ssub.s32 %s40, %s52
      %p80 = scmp.eq.s32.totalorder %s79, 0
      %s82 = sadd.s32 %s81, 1
      %s83 = scalar_select %p80, %s81, %s82
      %p86 = pneg %p80
      %p87 = scmp.eq.s32.totalorder %s33, 3
      %p88 = por %p86, %p87
      %p89 = scmp.ne.s32.totalorder %s81, %s84
      %p90 = scmp.eq.s32.totalorder %s33, 0
      %p91 = por %p89, %p90
      %p92 = scmp.ne.s32.totalorder %s81, %s84
      %p93 = scmp.eq.s32.totalorder %s38, 3
      %p94 = por %p92, %p93
      %p95 = scmp.ne.s32.totalorder %s84, %s85
      %p96 = scmp.eq.s32.totalorder %s38, 0
      %p97 = por %p95, %p96
      %p98 = scmp.ne.s32.totalorder %s84, %s85
      %p99 = scmp.eq.s32.totalorder %s39, 3
      %p100 = por %p98, %p99
      %p102 = scmp.ne.s32.totalorder %s85, %s101
      %p103 = scmp.eq.s32.totalorder %s39, 0
      %p104 = por %p102, %p103
      %s105 = ssub.s32 %s41, %s48
      %p106 = scmp.eq.s32.totalorder %s105, 0
      %s108 = sadd.s32 %s107, 1
      %s109 = scalar_select %p106, %s107, %s108
      %p112 = pneg %p106
      %p113 = scmp.eq.s32.totalorder %s33, 3
      %p114 = por %p112, %p113
      %p115 = scmp.ne.s32.totalorder %s107, %s110
      %p116 = scmp.eq.s32.totalorder %s33, 0
      %p117 = por %p115, %p116
      %p118 = scmp.ne.s32.totalorder %s107, %s110
      %p119 = scmp.eq.s32.totalorder %s38, 3
      %p120 = por %p118, %p119
      %p121 = scmp.ne.s32.totalorder %s110, %s111
      %p122 = scmp.eq.s32.totalorder %s38, 0
      %p123 = por %p121, %p122
      %p124 = scmp.ne.s32.totalorder %s110, %s111
      %p125 = scmp.eq.s32.totalorder %s39, 3
      %p126 = por %p124, %p125
      %p128 = scmp.ne.s32.totalorder %s111, %s127
      %p129 = scmp.eq.s32.totalorder %s39, 0
      %p130 = por %p128, %p129
      %s131 = ssub.s32 %s41, %s48
      %p132 = scmp.eq.s32.totalorder %s131, 0
      %s134 = sadd.s32 %s133, 1
      %s135 = scalar_select %p132, %s133, %s134
      %p138 = pneg %p132
      %p139 = scmp.eq.s32.totalorder %s33, 3
      %p140 = por %p138, %p139
      %p141 = scmp.ne.s32.totalorder %s133, %s136
      %p142 = scmp.eq.s32.totalorder %s33, 0
      %p143 = por %p141, %p142
      %p144 = scmp.ne.s32.totalorder %s133, %s136
      %p145 = scmp.eq.s32.totalorder %s38, 3
      %p146 = por %p144, %p145
      %p147 = scmp.ne.s32.totalorder %s136, %s137
      %p148 = scmp.eq.s32.totalorder %s38, 0
      %p149 = por %p147, %p148
      %p150 = scmp.ne.s32.totalorder %s136, %s137
      %p151 = scmp.eq.s32.totalorder %s39, 3
      %p152 = por %p150, %p151
      %p154 = scmp.ne.s32.totalorder %s137, %s153
      %p155 = scmp.eq.s32.totalorder %s39, 0
      %p156 = por %p154, %p155
      %s157 = ssub.s32 %s41, %s48
      %p158 = scmp.eq.s32.totalorder %s157, 0
      %s160 = sadd.s32 %s159, 1
      %s161 = scalar_select %p158, %s159, %s160
      %p164 = pneg %p158
      %p165 = scmp.eq.s32.totalorder %s33, 3
      %p166 = por %p164, %p165
      %p167 = scmp.ne.s32.totalorder %s159, %s162
      %p168 = scmp.eq.s32.totalorder %s33, 0
      %p169 = por %p167, %p168
      %p170 = scmp.ne.s32.totalorder %s159, %s162
      %p171 = scmp.eq.s32.totalorder %s38, 3
      %p172 = por %p170, %p171
      %p173 = scmp.ne.s32.totalorder %s162, %s163
      %p174 = scmp.eq.s32.totalorder %s38, 0
      %p175 = por %p173, %p174
      %p176 = scmp.ne.s32.totalorder %s162, %s163
      %p177 = scmp.eq.s32.totalorder %s39, 3
      %p178 = por %p176, %p177
      %p180 = scmp.ne.s32.totalorder %s163, %s179
      %p181 = scmp.eq.s32.totalorder %s39, 0
      %p182 = por %p180, %p181
      %s183 = ssub.s32 %s41, %s48
      %p184 = scmp.eq.s32.totalorder %s183, 0
      %s186 = sadd.s32 %s185, 1
      %s187 = scalar_select %p184, %s185, %s186
      %p190 = pneg %p184
      %p191 = scmp.eq.s32.totalorder %s33, 3
      %p192 = por %p190, %p191
      %p193 = scmp.ne.s32.totalorder %s185, %s188
      %p194 = scmp.eq.s32.totalorder %s33, 0
      %p195 = por %p193, %p194
      %p196 = scmp.ne.s32.totalorder %s185, %s188
      %p197 = scmp.eq.s32.totalorder %s38, 3
      %p198 = por %p196, %p197
      %p199 = scmp.ne.s32.totalorder %s188, %s189
      %p200 = scmp.eq.s32.totalorder %s38, 0
      %p201 = por %p199, %p200
      %p202 = scmp.ne.s32.totalorder %s188, %s189
      %p203 = scmp.eq.s32.totalorder %s39, 3
      %p204 = por %p202, %p203
      %p206 = scmp.ne.s32.totalorder %s189, %s205
      %p207 = scmp.eq.s32.totalorder %s39, 0
      %p208 = por %p206, %p207
      %s209 = ssub.s32 %s41, %s48
      %p210 = scmp.eq.s32.totalorder %s209, 0
      %s212 = sadd.s32 %s211, 1
      %s213 = scalar_select %p210, %s211, %s212
      %p216 = pneg %p210
      %p217 = scmp.eq.s32.totalorder %s33, 3
      %p218 = por %p216, %p217
      %p219 = scmp.ne.s32.totalorder %s211, %s214
      %p220 = scmp.eq.s32.totalorder %s33, 0
      %p221 = por %p219, %p220
      %p222 = scmp.ne.s32.totalorder %s211, %s214
      %p223 = scmp.eq.s32.totalorder %s38, 3
      %p224 = por %p222, %p223
      %p225 = scmp.ne.s32.totalorder %s214, %s215
      %p226 = scmp.eq.s32.totalorder %s38, 0
      %p227 = por %p225, %p226
      %p228 = scmp.ne.s32.totalorder %s214, %s215
      %p229 = scmp.eq.s32.totalorder %s39, 3
      %p230 = por %p228, %p229
      %p232 = scmp.ne.s32.totalorder %s215, %s231
      %p233 = scmp.eq.s32.totalorder %s39, 0
      %p234 = por %p232, %p233
      %s235 = ssub.s32 %s41, %s48
      %p236 = scmp.eq.s32.totalorder %s235, 0
      %s238 = sadd.s32 %s237, 1
      %s239 = scalar_select %p236, %s237, %s238
      %p242 = pneg %p236
      %p243 = scmp.eq.s32.totalorder %s33, 3
      %p244 = por %p242, %p243
      %p245 = scmp.ne.s32.totalorder %s237, %s240
      %p246 = scmp.eq.s32.totalorder %s33, 0
      %p247 = por %p245, %p246
      %p248 = scmp.ne.s32.totalorder %s237, %s240
      %p249 = scmp.eq.s32.totalorder %s38, 3
      %p250 = por %p248, %p249
      %p251 = scmp.ne.s32.totalorder %s240, %s241
      %p252 = scmp.eq.s32.totalorder %s38, 0
      %p253 = por %p251, %p252
      %p254 = scmp.ne.s32.totalorder %s240, %s241
      %p255 = scmp.eq.s32.totalorder %s39, 3
      %p256 = por %p254, %p255
      %p258 = scmp.ne.s32.totalorder %s241, %s257
      %p259 = scmp.eq.s32.totalorder %s39, 0
      %p260 = por %p258, %p259
      %s261 = ssub.s32 %s41, %s48
      %p262 = scmp.eq.s32.totalorder %s261, 0
      %s264 = sadd.s32 %s263, 1
      %s265 = scalar_select %p262, %s263, %s264
      %p268 = pneg %p262
      %p269 = scmp.eq.s32.totalorder %s33, 3
      %p270 = por %p268, %p269
      %p271 = scmp.ne.s32.totalorder %s263, %s266
      %p272 = scmp.eq.s32.totalorder %s33, 0
      %p273 = por %p271, %p272
      %p274 = scmp.ne.s32.totalorder %s263, %s266
      %p275 = scmp.eq.s32.totalorder %s38, 3
      %p276 = por %p274, %p275
      %p277 = scmp.ne.s32.totalorder %s266, %s267
      %p278 = scmp.eq.s32.totalorder %s38, 0
      %p279 = por %p277, %p278
      %p280 = scmp.ne.s32.totalorder %s266, %s267
      %p281 = scmp.eq.s32.totalorder %s39, 3
      %p282 = por %p280, %p281
      %p284 = scmp.ne.s32.totalorder %s267, %s283
      %p285 = scmp.eq.s32.totalorder %s39, 0
      %p286 = por %p284, %p285
      %s287 = ssub.s32 %s41, %s48
      %p288 = scmp.eq.s32.totalorder %s287, 0
      %s290 = sadd.s32 %s289, 1
      %s291 = scalar_select %p288, %s289, %s290
      %p294 = pneg %p288
      %p295 = scmp.eq.s32.totalorder %s33, 3
      %p296 = por %p294, %p295
      %p297 = scmp.ne.s32.totalorder %s289, %s292
      %p298 = scmp.eq.s32.totalorder %s33, 0
      %p299 = por %p297, %p298
      %p300 = scmp.ne.s32.totalorder %s289, %s292
      %p301 = scmp.eq.s32.totalorder %s38, 3
      %p302 = por %p300, %p301
      %p303 = scmp.ne.s32.totalorder %s292, %s293
      %p304 = scmp.eq.s32.totalorder %s38, 0
      %p305 = por %p303, %p304
      %p306 = scmp.ne.s32.totalorder %s292, %s293
      %p307 = scmp.eq.s32.totalorder %s39, 3
      %p308 = por %p306, %p307
      %p310 = scmp.ne.s32.totalorder %s293, %s309
      %p311 = scmp.eq.s32.totalorder %s39, 0
      %p312 = por %p310, %p311
      %s313 = ssub.s32 %s41, %s48
      %p314 = scmp.eq.s32.totalorder %s313, 0
      %s316 = sadd.s32 %s315, 1
      %s317 = scalar_select %p314, %s315, %s316
      %p320 = pneg %p314
      %p321 = scmp.eq.s32.totalorder %s33, 3
      %p322 = por %p320, %p321
      %p323 = scmp.ne.s32.totalorder %s315, %s318
      %p324 = scmp.eq.s32.totalorder %s33, 0
      %p325 = por %p323, %p324
      %p326 = scmp.ne.s32.totalorder %s315, %s318
      %p327 = scmp.eq.s32.totalorder %s38, 3
      %p328 = por %p326, %p327
      %p329 = scmp.ne.s32.totalorder %s318, %s319
      %p330 = scmp.eq.s32.totalorder %s38, 0
      %p331 = por %p329, %p330
      %p332 = scmp.ne.s32.totalorder %s318, %s319
      %p333 = scmp.eq.s32.totalorder %s39, 3
      %p334 = por %p332, %p333
      %p336 = scmp.ne.s32.totalorder %s319, %s335
      %p337 = scmp.eq.s32.totalorder %s39, 0
      %p338 = por %p336, %p337
      %s339 = ssub.s32 %s41, %s48
      %p340 = scmp.eq.s32.totalorder %s339, 0
      %s342 = sadd.s32 %s341, 1
      %s343 = scalar_select %p340, %s341, %s342
      %p346 = pneg %p340
      %p347 = scmp.eq.s32.totalorder %s33, 3
      %p348 = por %p346, %p347
      %p349 = scmp.ne.s32.totalorder %s341, %s344
      %p350 = scmp.eq.s32.totalorder %s33, 0
      %p351 = por %p349, %p350
      %p352 = scmp.ne.s32.totalorder %s341, %s344
      %p353 = scmp.eq.s32.totalorder %s38, 3
      %p354 = por %p352, %p353
      %p355 = scmp.ne.s32.totalorder %s344, %s345
      %p356 = scmp.eq.s32.totalorder %s38, 0
      %p357 = por %p355, %p356
      %p358 = scmp.ne.s32.totalorder %s344, %s345
      %p359 = scmp.eq.s32.totalorder %s39, 3
      %p360 = por %p358, %p359
      %p362 = scmp.ne.s32.totalorder %s345, %s361
      %p363 = scmp.eq.s32.totalorder %s39, 0
      %p364 = por %p362, %p363
      %s365 = ssub.s32 %s41, %s48
      %p366 = scmp.eq.s32.totalorder %s365, 0
      %s368 = sadd.s32 %s367, 1
      %s369 = scalar_select %p366, %s367, %s368
      %p372 = pneg %p366
      %p373 = scmp.eq.s32.totalorder %s33, 3
      %p374 = por %p372, %p373
      %p375 = scmp.ne.s32.totalorder %s367, %s370
      %p376 = scmp.eq.s32.totalorder %s33, 0
      %p377 = por %p375, %p376
      %p378 = scmp.ne.s32.totalorder %s367, %s370
      %p379 = scmp.eq.s32.totalorder %s38, 3
      %p380 = por %p378, %p379
      %p381 = scmp.ne.s32.totalorder %s370, %s371
      %p382 = scmp.eq.s32.totalorder %s38, 0
      %p383 = por %p381, %p382
      %p384 = scmp.ne.s32.totalorder %s370, %s371
      %p385 = scmp.eq.s32.totalorder %s39, 3
      %p386 = por %p384, %p385
      %p388 = scmp.ne.s32.totalorder %s371, %s387
      %p389 = scmp.eq.s32.totalorder %s39, 0
      %p390 = por %p388, %p389
      %s391 = ssub.s32 %s41, %s48
      %p392 = scmp.eq.s32.totalorder %s391, 0
      %s394 = sadd.s32 %s393, 1
      %s395 = scalar_select %p392, %s393, %s394
      %p398 = pneg %p392
      %p399 = scmp.eq.s32.totalorder %s33, 3
      %p400 = por %p398, %p399
      %p401 = scmp.ne.s32.totalorder %s393, %s396
      %p402 = scmp.eq.s32.totalorder %s33, 0
      %p403 = por %p401, %p402
      %p404 = scmp.ne.s32.totalorder %s393, %s396
      %p405 = scmp.eq.s32.totalorder %s38, 3
      %p406 = por %p404, %p405
      %p407 = scmp.ne.s32.totalorder %s396, %s397
      %p408 = scmp.eq.s32.totalorder %s38, 0
      %p409 = por %p407, %p408
      %p410 = scmp.ne.s32.totalorder %s396, %s397
      %p411 = scmp.eq.s32.totalorder %s39, 3
      %p412 = por %p410, %p411
      %p414 = scmp.ne.s32.totalorder %s397, %s413
      %p415 = scmp.eq.s32.totalorder %s39, 0
      %p416 = por %p414, %p415
      %s418 = sadd.s32 %s417, 1
      %p421 = scmp.eq.s32.totalorder %s33, 3
      %p422 = scmp.ne.s32.totalorder %s417, %s419
      %p423 = scmp.eq.s32.totalorder %s33, 0
      %p424 = por %p422, %p423
      %p425 = scmp.ne.s32.totalorder %s417, %s419
      %p426 = scmp.eq.s32.totalorder %s38, 3
      %p427 = por %p425, %p426
      %p428 = scmp.ne.s32.totalorder %s419, %s420
      %p429 = scmp.eq.s32.totalorder %s38, 0
      %p430 = por %p428, %p429
      %p431 = scmp.ne.s32.totalorder %s419, %s420
      %p432 = scmp.eq.s32.totalorder %s39, 3
      %p433 = por %p431, %p432
      %p435 = scmp.ne.s32.totalorder %s420, %s434
      %p436 = scmp.eq.s32.totalorder %s39, 0
      %p437 = por %p435, %p436
      %s439 = sadd.s32 %s438, 1
      %p442 = scmp.eq.s32.totalorder %s33, 3
      %p443 = scmp.ne.s32.totalorder %s438, %s440
      %p444 = scmp.eq.s32.totalorder %s33, 0
      %p445 = por %p443, %p444
      %p446 = scmp.ne.s32.totalorder %s438, %s440
      %p447 = scmp.eq.s32.totalorder %s38, 3
      %p448 = por %p446, %p447
      %p449 = scmp.ne.s32.totalorder %s440, %s441
      %p450 = scmp.eq.s32.totalorder %s38, 0
      %p451 = por %p449, %p450
      %p452 = scmp.ne.s32.totalorder %s440, %s441
      %p453 = scmp.eq.s32.totalorder %s39, 3
      %p454 = por %p452, %p453
      %p456 = scmp.ne.s32.totalorder %s441, %s455
      %p457 = scmp.eq.s32.totalorder %s39, 0
      %p458 = por %p456, %p457
      %s460 = sadd.s32 %s459, 1
      %p463 = scmp.eq.s32.totalorder %s33, 3
      %p464 = scmp.ne.s32.totalorder %s459, %s461
      %p465 = scmp.eq.s32.totalorder %s33, 0
      %p466 = por %p464, %p465
      %p467 = scmp.ne.s32.totalorder %s459, %s461
      %p468 = scmp.eq.s32.totalorder %s38, 3
      %p469 = por %p467, %p468
      %p470 = scmp.ne.s32.totalorder %s461, %s462
      %p471 = scmp.eq.s32.totalorder %s38, 0
      %p472 = por %p470, %p471
      %p473 = scmp.ne.s32.totalorder %s461, %s462
      %p474 = scmp.eq.s32.totalorder %s39, 3
      %p475 = por %p473, %p474
      %p477 = scmp.ne.s32.totalorder %s462, %s476
      %p478 = scmp.eq.s32.totalorder %s39, 0
      %p479 = por %p477, %p478
      %s481 = sadd.s32 %s480, 1
      %p484 = scmp.eq.s32.totalorder %s33, 3
      %p485 = scmp.ne.s32.totalorder %s480, %s482
      %p486 = scmp.eq.s32.totalorder %s33, 0
      %p487 = por %p485, %p486
      %p488 = scmp.ne.s32.totalorder %s480, %s482
      %p489 = scmp.eq.s32.totalorder %s38, 3
      %p490 = por %p488, %p489
      %p491 = scmp.ne.s32.totalorder %s482, %s483
      %p492 = scmp.eq.s32.totalorder %s38, 0
      %p493 = por %p491, %p492
      %p494 = scmp.ne.s32.totalorder %s482, %s483
      %p495 = scmp.eq.s32.totalorder %s39, 3
      %p496 = por %p494, %p495
      %p498 = scmp.ne.s32.totalorder %s483, %s497
      %p499 = scmp.eq.s32.totalorder %s39, 0
      %p500 = por %p498, %p499
      %s501 = ssub.s32 %s40, %s52
      %p502 = scmp.eq.s32.totalorder %s501, 0
      %s504 = sadd.s32 %s503, 1
      %s505 = scalar_select %p502, %s503, %s504
      %p508 = pneg %p502
      %p509 = scmp.eq.s32.totalorder %s33, 3
      %p510 = por %p508, %p509
      %p511 = scmp.ne.s32.totalorder %s503, %s506
      %p512 = scmp.eq.s32.totalorder %s33, 0
      %p513 = por %p511, %p512
      %p514 = scmp.ne.s32.totalorder %s503, %s506
      %p515 = scmp.eq.s32.totalorder %s38, 3
      %p516 = por %p514, %p515
      %p517 = scmp.ne.s32.totalorder %s506, %s507
      %p518 = scmp.eq.s32.totalorder %s38, 0
      %p519 = por %p517, %p518
      %p520 = scmp.ne.s32.totalorder %s506, %s507
      %p521 = scmp.eq.s32.totalorder %s39, 3
      %p522 = por %p520, %p521
      %p524 = scmp.ne.s32.totalorder %s507, %s523
      %p525 = scmp.eq.s32.totalorder %s39, 0
      %p526 = por %p524, %p525
      %p527 = scmp.le.s32.totalorder 1, %s33
      %p528 = scmp.lt.s32.totalorder %s33, 5
      %p529 = pnand %p527, %p528
      %p530 = pneg %p529
      // Predicated region
      $region9: #{tpu_custom_call.1} parent=5 // pred_check
        _
      $region10: #{tpu_custom_call.1} parent=5 // pred_check_branch
        %532 = sbr.rel (%p529) target = $region12
      $region11: #{tpu_custom_call.1} parent=5 // pred_region
        %s533 = ssub.s32 %s33, 1
        // Predicated region
        $region13: #{tpu_custom_call.1} parent=11 // pred_check
          %p534 = pneg %p430
        $region14: #{tpu_custom_call.1} parent=11 // pred_check_branch
          %536 = sbr.rel (%p534) target = $region16
        $region15: #{tpu_custom_call.1} parent=11 // pred_region
          _
        $region16: #{tpu_custom_call.1} parent=11 // pred_fallthru
          _
        // Predicated region
        $region17: #{tpu_custom_call.1} parent=11 // pred_check
          %p537 = pneg %p451
        $region18: #{tpu_custom_call.1} parent=11 // pred_check_branch
          %539 = sbr.rel (%p537) target = $region20
        $region19: #{tpu_custom_call.1} parent=11 // pred_region
          _
        $region20: #{tpu_custom_call.1} parent=11 // pred_fallthru
          _
        // Predicated region
        $region21: #{tpu_custom_call.1} parent=11 // pred_check
          %p540 = pneg %p472
        $region22: #{tpu_custom_call.1} parent=11 // pred_check_branch
          %542 = sbr.rel (%p540) target = $region24
        $region23: #{tpu_custom_call.1} parent=11 // pred_region
          _
        $region24: #{tpu_custom_call.1} parent=11 // pred_fallthru
          _
        // Predicated region
        $region25: #{tpu_custom_call.1} parent=11 // pred_check
          %p543 = pneg %p493
        $region26: #{tpu_custom_call.1} parent=11 // pred_check_branch
          %545 = sbr.rel (%p543) target = $region28
        $region27: #{tpu_custom_call.1} parent=11 // pred_region
          _
        $region28: #{tpu_custom_call.1} parent=11 // pred_fallthru
          _
      $region12: #{tpu_custom_call.1} parent=5 // pred_fallthru
        _
      %p546 = scmp.lt.s32.totalorder %s33, 4
      // Predicated region
      $region29: #{tpu_custom_call.1} parent=5 // pred_check
        %p547 = pneg %p546
      $region30: #{tpu_custom_call.1} parent=5 // pred_check_branch
        %549 = sbr.rel (%p547) target = $region32
      $region31: #{tpu_custom_call.1} parent=5 // pred_region
        // Predicated region
        $region33: #{tpu_custom_call.1} parent=31 // pred_check
          %p550 = pneg %p65
        $region34: #{tpu_custom_call.1} parent=31 // pred_check_branch
          %552 = sbr.rel (%p550) target = $region36
        $region35: #{tpu_custom_call.1} parent=31 // pred_region
          %s553 = sand.u32 %s55, 1
          %s554 = scalar_lea.sflag [#allocation3], %s553
          %s555 = sand.u32 %s55, 1
          %s556 = smul.addr %s555, 8
          %s557 = scalar_lea.vmem [#allocation2], %s556
          %s559 = ssub.s32 128, 128
          %560 = vsyncadd %s554, %s559
          %s561 = smul.addr %s40, 128
          %s562 = scalar_lea.hbm %s0, %s561
          %s564 = sshll.u32 %s557, 4
          %s565 = int_to_ptr.vmem [resolvable:$true] %s564
          %567 = dma.hbm_to_vmem [thread:$0]  %s562, 128, %s565, %s554
        $region36: #{tpu_custom_call.1} parent=31 // pred_fallthru
          _
        // Predicated region
        $region37: #{tpu_custom_call.1} parent=31 // pred_check
          %p568 = pneg %p91
        $region38: #{tpu_custom_call.1} parent=31 // pred_check_branch
          %570 = sbr.rel (%p568) target = $region40
        $region39: #{tpu_custom_call.1} parent=31 // pred_region
          %s571 = sand.u32 %s81, 1
          %s572 = scalar_lea.sflag [#allocation6], %s571
          %s573 = sand.u32 %s81, 1
          %s574 = scalar_lea.vmem [#allocation5], %s573
          %s576 = ssub.s32 16, 16
          %577 = vsyncadd %s572, %s576
          %s578 = smul.addr %s40, 16
          %s579 = scalar_lea.hbm %s1, %s578
          %s581 = sshll.u32 %s574, 4
          %s582 = int_to_ptr.vmem [resolvable:$true] %s581
          %584 = dma.hbm_to_vmem [thread:$0]  %s579, 16, %s582, %s572
        $region40: #{tpu_custom_call.1} parent=31 // pred_fallthru
          _
        // Predicated region
        $region41: #{tpu_custom_call.1} parent=31 // pred_check
          %p585 = pneg %p117
        $region42: #{tpu_custom_call.1} parent=31 // pred_check_branch
          %587 = sbr.rel (%p585) target = $region44
        $region43: #{tpu_custom_call.1} parent=31 // pred_region
          %p588 = scmp.lt.s32.totalorder %s41, 1
          %s589 = scalar_select %p588, %s41, 1
          %s590 = smul.addr %s589, 4
          %s591 = smul.addr %s590, 4
          %s592 = scalar_lea.vmem %s2, %s591
        $region44: #{tpu_custom_call.1} parent=31 // pred_fallthru
          _
        // Predicated region
        $region45: #{tpu_custom_call.1} parent=31 // pred_check
          %p593 = pneg %p143
        $region46: #{tpu_custom_call.1} parent=31 // pred_check_branch
          %595 = sbr.rel (%p593) target = $region48
        $region47: #{tpu_custom_call.1} parent=31 // pred_region
          %p596 = scmp.lt.s32.totalorder %s41, 1
          %s597 = scalar_select %p596, %s41, 1
          %s598 = scalar_lea.vmem %s3, %s597
        $region48: #{tpu_custom_call.1} parent=31 // pred_fallthru
          _
        // Predicated region
        $region49: #{tpu_custom_call.1} parent=31 // pred_check
          %p599 = pneg %p169
        $region50: #{tpu_custom_call.1} parent=31 // pred_check_branch
          %601 = sbr.rel (%p599) target = $region52
        $region51: #{tpu_custom_call.1} parent=31 // pred_region
          %p602 = scmp.lt.s32.totalorder %s41, 1
          %s603 = scalar_select %p602, %s41, 1
          %s604 = smul.addr %s603, 4
          %s605 = smul.addr %s604, 4
          %s606 = scalar_lea.vmem %s4, %s605
        $region52: #{tpu_custom_call.1} parent=31 // pred_fallthru
          _
        // Predicated region
        $region53: #{tpu_custom_call.1} parent=31 // pred_check
          %p607 = pneg %p195
        $region54: #{tpu_custom_call.1} parent=31 // pred_check_branch
          %609 = sbr.rel (%p607) target = $region56
        $region55: #{tpu_custom_call.1} parent=31 // pred_region
          %p610 = scmp.lt.s32.totalorder %s41, 1
          %s611 = scalar_select %p610, %s41, 1
          %s612 = scalar_lea.vmem %s5, %s611
        $region56: #{tpu_custom_call.1} parent=31 // pred_fallthru
          _
        // Predicated region
        $region57: #{tpu_custom_call.1} parent=31 // pred_check
          %p613 = pneg %p221
        $region58: #{tpu_custom_call.1} parent=31 // pred_check_branch
          %615 = sbr.rel (%p613) target = $region60
        $region59: #{tpu_custom_call.1} parent=31 // pred_region
          %p616 = scmp.lt.s32.totalorder %s41, 1
          %s617 = scalar_select %p616, %s41, 1
          %s618 = scalar_lea.vmem %s6, %s617
        $region60: #{tpu_custom_call.1} parent=31 // pred_fallthru
          _
        // Predicated region
        $region61: #{tpu_custom_call.1} parent=31 // pred_check
          %p619 = pneg %p247
        $region62: #{tpu_custom_call.1} parent=31 // pred_check_branch
          %621 = sbr.rel (%p619) target = $region64
        $region63: #{tpu_custom_call.1} parent=31 // pred_region
          %p622 = scmp.lt.s32.totalorder %s41, 1
          %s623 = scalar_select %p622, %s41, 1
          %s624 = scalar_lea.vmem %s7, %s623
        $region64: #{tpu_custom_call.1} parent=31 // pred_fallthru
          _
        // Predicated region
        $region65: #{tpu_custom_call.1} parent=31 // pred_check
          %p625 = pneg %p273
        $region66: #{tpu_custom_call.1} parent=31 // pred_check_branch
          %627 = sbr.rel (%p625) target = $region68
        $region67: #{tpu_custom_call.1} parent=31 // pred_region
          %p628 = scmp.lt.s32.totalorder %s41, 1
          %s629 = scalar_select %p628, %s41, 1
          %s630 = scalar_lea.vmem %s8, %s629
        $region68: #{tpu_custom_call.1} parent=31 // pred_fallthru
          _
        // Predicated region
        $region69: #{tpu_custom_call.1} parent=31 // pred_check
          %p631 = pneg %p299
        $region70: #{tpu_custom_call.1} parent=31 // pred_check_branch
          %633 = sbr.rel (%p631) target = $region72
        $region71: #{tpu_custom_call.1} parent=31 // pred_region
          %p634 = scmp.lt.s32.totalorder %s41, 1
          %s635 = scalar_select %p634, %s41, 1
          %s636 = scalar_lea.vmem %s9, %s635
        $region72: #{tpu_custom_call.1} parent=31 // pred_fallthru
          _
        // Predicated region
        $region73: #{tpu_custom_call.1} parent=31 // pred_check
          %p637 = pneg %p325
        $region74: #{tpu_custom_call.1} parent=31 // pred_check_branch
          %639 = sbr.rel (%p637) target = $region76
        $region75: #{tpu_custom_call.1} parent=31 // pred_region
          %p640 = scmp.lt.s32.totalorder %s41, 1
          %s641 = scalar_select %p640, %s41, 1
          %s642 = smul.addr %s641, 4
          %s643 = smul.addr %s642, 4
          %s644 = scalar_lea.vmem %s10, %s643
        $region76: #{tpu_custom_call.1} parent=31 // pred_fallthru
          _
        // Predicated region
        $region77: #{tpu_custom_call.1} parent=31 // pred_check
          %p645 = pneg %p351
        $region78: #{tpu_custom_call.1} parent=31 // pred_check_branch
          %647 = sbr.rel (%p645) target = $region80
        $region79: #{tpu_custom_call.1} parent=31 // pred_region
          %p648 = scmp.lt.s32.totalorder %s41, 1
          %s649 = scalar_select %p648, %s41, 1
          %s650 = scalar_lea.vmem %s11, %s649
        $region80: #{tpu_custom_call.1} parent=31 // pred_fallthru
          _
        // Predicated region
        $region81: #{tpu_custom_call.1} parent=31 // pred_check
          %p651 = pneg %p377
        $region82: #{tpu_custom_call.1} parent=31 // pred_check_branch
          %653 = sbr.rel (%p651) target = $region84
        $region83: #{tpu_custom_call.1} parent=31 // pred_region
          %p654 = scmp.lt.s32.totalorder %s41, 1
          %s655 = scalar_select %p654, %s41, 1
          %s656 = smul.addr %s655, 8
          %s657 = smul.addr %s656, 4
          %s658 = scalar_lea.vmem %s12, %s657
        $region84: #{tpu_custom_call.1} parent=31 // pred_fallthru
          _
        // Predicated region
        $region85: #{tpu_custom_call.1} parent=31 // pred_check
          %p659 = pneg %p403
        $region86: #{tpu_custom_call.1} parent=31 // pred_check_branch
          %661 = sbr.rel (%p659) target = $region88
        $region87: #{tpu_custom_call.1} parent=31 // pred_region
          %p662 = scmp.lt.s32.totalorder %s41, 1
          %s663 = scalar_select %p662, %s41, 1
          %s664 = scalar_lea.vmem %s13, %s663
        $region88: #{tpu_custom_call.1} parent=31 // pred_fallthru
          _
      $region32: #{tpu_custom_call.1} parent=5 // pred_fallthru
        _
      %p665 = scmp.le.s32.totalorder 1, %s33
      %p666 = scmp.lt.s32.totalorder %s33, 5
      %p667 = pnand %p665, %p666
      %p668 = pneg %p667
      // Predicated region
      $region89: #{tpu_custom_call.1} parent=5 // pred_check
        _
      $region90: #{tpu_custom_call.1} parent=5 // pred_check_branch
        %670 = sbr.rel (%p667) target = $region92
      $region91: #{tpu_custom_call.1} parent=5 // pred_region
        %s671 = ssub.s32 %s33, 1
        %s672 = sand.u32 %s58, 1
        %s673 = scalar_lea.sflag [#allocation3], %s672
        %s674 = sand.u32 %s58, 1
        %s675 = smul.addr %s674, 8
        %s676 = scalar_lea.vmem [#allocation2], %s675
        // Predicated region
        $region93: #{tpu_custom_call.1} parent=91 // pred_check
          %p677 = pneg %p71
        $region94: #{tpu_custom_call.1} parent=91 // pred_check_branch
          %679 = sbr.rel (%p677) target = $region96
        $region95: #{tpu_custom_call.1} parent=91 // pred_region
          %680 = dma.done %s673, 128
        $region96: #{tpu_custom_call.1} parent=91 // pred_fallthru
          _
        %s681 = sand.u32 %s84, 1
        %s682 = scalar_lea.sflag [#allocation6], %s681
        %s683 = sand.u32 %s84, 1
        %s684 = scalar_lea.vmem [#allocation5], %s683
        // Predicated region
        $region97: #{tpu_custom_call.1} parent=91 // pred_check
          %p685 = pneg %p97
        $region98: #{tpu_custom_call.1} parent=91 // pred_check_branch
          %687 = sbr.rel (%p685) target = $region100
        $region99: #{tpu_custom_call.1} parent=91 // pred_region
          %688 = dma.done %s682, 16
        $region100: #{tpu_custom_call.1} parent=91 // pred_fallthru
          _
        %s689 = sand.u32 %s58, 1
        %s690 = scalar_lea.sflag [#allocation3], %s689
        %s691 = sand.u32 %s58, 1
        %s692 = smul.addr %s691, 8
        %s693 = scalar_lea.vmem [#allocation2], %s692
        %p694 = pneg %p71
        %p695 = pneg %p68
        %s696 = sand.u32 %s84, 1
        %s697 = scalar_lea.sflag [#allocation6], %s696
        %s698 = sand.u32 %s84, 1
        %s699 = scalar_lea.vmem [#allocation5], %s698
        %p700 = pneg %p97
        %p701 = pneg %p94
        %p702 = scmp.lt.s32.totalorder %s43, 1
        %s703 = scalar_select %p702, %s43, 1
        %s704 = smul.addr %s703, 4
        %s705 = smul.addr %s704, 4
        %s706 = scalar_lea.vmem %s2, %s705
        %p707 = pneg %p123
        %p708 = pneg %p120
        %p709 = scmp.lt.s32.totalorder %s43, 1
        %s710 = scalar_select %p709, %s43, 1
        %s711 = scalar_lea.vmem %s3, %s710
        %p712 = pneg %p149
        %p713 = pneg %p146
        %p714 = scmp.lt.s32.totalorder %s43, 1
        %s715 = scalar_select %p714, %s43, 1
        %s716 = smul.addr %s715, 4
        %s717 = smul.addr %s716, 4
        %s718 = scalar_lea.vmem %s4, %s717
        %p719 = pneg %p175
        %p720 = pneg %p172
        %p721 = scmp.lt.s32.totalorder %s43, 1
        %s722 = scalar_select %p721, %s43, 1
        %s723 = scalar_lea.vmem %s5, %s722
        %p724 = pneg %p201
        %p725 = pneg %p198
        %p726 = scmp.lt.s32.totalorder %s43, 1
        %s727 = scalar_select %p726, %s43, 1
        %s728 = scalar_lea.vmem %s6, %s727
        %p729 = pneg %p227
        %p730 = pneg %p224
        %p731 = scmp.lt.s32.totalorder %s43, 1
        %s732 = scalar_select %p731, %s43, 1
        %s733 = scalar_lea.vmem %s7, %s732
        %p734 = pneg %p253
        %p735 = pneg %p250
        %p736 = scmp.lt.s32.totalorder %s43, 1
        %s737 = scalar_select %p736, %s43, 1
        %s738 = scalar_lea.vmem %s8, %s737
        %p739 = pneg %p279
        %p740 = pneg %p276
        %p741 = scmp.lt.s32.totalorder %s43, 1
        %s742 = scalar_select %p741, %s43, 1
        %s743 = scalar_lea.vmem %s9, %s742
        %p744 = pneg %p305
        %p745 = pneg %p302
        %p746 = scmp.lt.s32.totalorder %s43, 1
        %s747 = scalar_select %p746, %s43, 1
        %s748 = smul.addr %s747, 4
        %s749 = smul.addr %s748, 4
        %s750 = scalar_lea.vmem %s10, %s749
        %p751 = pneg %p331
        %p752 = pneg %p328
        %p753 = scmp.lt.s32.totalorder %s43, 1
        %s754 = scalar_select %p753, %s43, 1
        %s755 = scalar_lea.vmem %s11, %s754
        %p756 = pneg %p357
        %p757 = pneg %p354
        %p758 = scmp.lt.s32.totalorder %s43, 1
        %s759 = scalar_select %p758, %s43, 1
        %s760 = smul.addr %s759, 8
        %s761 = smul.addr %s760, 4
        %s762 = scalar_lea.vmem %s12, %s761
        %p763 = pneg %p383
        %p764 = pneg %p380
        %p765 = scmp.lt.s32.totalorder %s43, 1
        %s766 = scalar_select %p765, %s43, 1
        %s767 = scalar_lea.vmem %s13, %s766
        %p768 = pneg %p409
        %p769 = pneg %p406
        %p770 = pneg %p430
        %p771 = pneg %p427
        %p772 = pneg %p451
        %p773 = pneg %p448
        %p774 = pneg %p472
        %p775 = pneg %p469
        %p776 = pneg %p493
        %p777 = pneg %p490
        %p778 = pneg %p519
        %p779 = pneg %p516
        %s780 = sand.u32 %s506, 1
        %s781 = scalar_lea.sflag [#allocation4], %s780
        %s782 = sand.u32 %s506, 1
        %s783 = smul.addr %s782, 8
        %s784 = scalar_lea.vmem [#allocation7], %s783
        %p785 = scmp.lt.s32.totalorder %s43, 1
        %s786 = scalar_select %p785, %s43, 1
        %s787 = smul.addr %s786, 4
        %s788 = smul.addr %s787, 4
        %s789 = scalar_lea.vmem %s2, %s788
        %p790 = scmp.lt.s32.totalorder %s43, 1
        %s791 = scalar_select %p790, %s43, 1
        %s792 = scalar_lea.vmem %s3, %s791
        %p793 = scmp.lt.s32.totalorder %s43, 1
        %s794 = scalar_select %p793, %s43, 1
        %s795 = smul.addr %s794, 4
        %s796 = smul.addr %s795, 4
        %s797 = scalar_lea.vmem %s4, %s796
        %p798 = scmp.lt.s32.totalorder %s43, 1
        %s799 = scalar_select %p798, %s43, 1
        %s800 = scalar_lea.vmem %s5, %s799
        %p801 = scmp.lt.s32.totalorder %s43, 1
        %s802 = scalar_select %p801, %s43, 1
        %s803 = scalar_lea.vmem %s6, %s802
        %p804 = scmp.lt.s32.totalorder %s43, 1
        %s805 = scalar_select %p804, %s43, 1
        %s806 = scalar_lea.vmem %s7, %s805
        %p807 = scmp.lt.s32.totalorder %s43, 1
        %s808 = scalar_select %p807, %s43, 1
        %s809 = scalar_lea.vmem %s8, %s808
        %p810 = scmp.lt.s32.totalorder %s43, 1
        %s811 = scalar_select %p810, %s43, 1
        %s812 = scalar_lea.vmem %s9, %s811
        %p813 = scmp.lt.s32.totalorder %s43, 1
        %s814 = scalar_select %p813, %s43, 1
        %s815 = smul.addr %s814, 4
        %s816 = smul.addr %s815, 4
        %s817 = scalar_lea.vmem %s10, %s816
        %p818 = scmp.lt.s32.totalorder %s43, 1
        %s819 = scalar_select %p818, %s43, 1
        %s820 = scalar_lea.vmem %s11, %s819
        %p821 = scmp.lt.s32.totalorder %s43, 1
        %s822 = scalar_select %p821, %s43, 1
        %s823 = smul.addr %s822, 8
        %s824 = smul.addr %s823, 4
        %s825 = scalar_lea.vmem %s12, %s824
        %p826 = scmp.lt.s32.totalorder %s43, 1
        %s827 = scalar_select %p826, %s43, 1
        %s828 = scalar_lea.vmem %s13, %s827
        %p830 = scmp.eq.s32.totalorder %s43, 0
        // Predicated region
        $region101: #{tpu_custom_call.1} parent=91 // pred_check
          %p831 = pneg %p830
        $region102: #{tpu_custom_call.1} parent=91 // pred_check_branch
          %833 = sbr.rel (%p831) target = $region104
        $region103: #{tpu_custom_call.1} parent=91 // pred_region
          %v834 = vld [vmem:[%s676] sm:$0xff]
          %vm835 = vcmask 261120
          %836 = vst.msk [vmem:[%s784] sm:$0xff] %vm835, %v834
        $region104: #{tpu_custom_call.1} parent=91 // pred_fallthru
          _
        %v837 = vld [vmem:[%s784] sm:$0xff]
        %v838 = vld [vmem:[%s803] sm:$0x1]
        %v839 = vld [vmem:[%s806] sm:$0x1]
        %vm840 = vcmask 261120
        %v841 = vsel %vm840, %v837, 0.0
        %842 = vadd.xlane.f32.xlu0 %v841
        %v843 = vpop.xlane.xlu0 %842
        %v844 = vrcp.pop 32.0
        %v845 = vmul.f32 %v843, %v844
        %v846 = vsub.f32 %v837, %v845
        %v847 = vmul.f32 %v846, %v846
        %v848 = vsel %vm840, %v847, 0.0
        %849 = vadd.xlane.f32.xlu0 %v848
        %v850 = vpop.xlane.xlu0 %849
        %v851 = vmul.f32 %v850, %v844
        %v852 = vadd.f32 %v851, 1e-05
        %v853 = vrsqrt.pop %v852
        %v854 = vmul.f32 %v846, %v853
        %v856 = vlaneseq
        %v857 = vshrl.u32 %v856, 7
        %v858 = vsub.s32 0, %v857
        %v859 = vrot.slane %v838, %v858
        %v861 = vmul.f32 %v854, %v859
        %v863 = vlaneseq
        %v864 = vshrl.u32 %v863, 7
        %v865 = vsub.s32 0, %v864
        %v866 = vrot.slane %v839, %v865
        %v868 = vadd.f32 %v861, %v866
        %v869 = vpack.c.bf16 %v868, %v868
        %v870 = vld [vmem:[%s789] sm:$0xf]
        %v871 = vld [vmem:[%s789 + $0x4] sm:$0xf]
        %v872 = vld [vmem:[%s789 + $0x8] sm:$0xf]
        %v873 = vld [vmem:[%s789 + $0xc] sm:$0xf]
        %v874 = vld [vmem:[%s792] sm:$0x1]
        %v876 = vlaneseq
        %v877 = vshrl.u32 %v876, 7
        %v878 = vsub.s32 0, %v877
        %v879 = vrot.slane %v874, %v878
        %v885 = vunpack.c.l.b16 %v870
        %v886 = vunpack.c.l.b16 %v871
        %v887 = vunpack.c.l.b16 %v872
        %v888 = vunpack.c.l.b16 %v873
        %v889 = vpack.c.b16 %v886, %v885
        %v890 = vpack.c.b16 %v888, %v887
        %v894 = vsel %vm840, %v869, 0
        %896 = vmatprep.subr.bf16.mxu0 0
        %897 = vmatpush1.bf16.msra.mxu0 0
        %898 = vmatprep.subr.bf16.mxu0 0
        %899 = vmatpush1.bf16.msra.mxu0 0
        %900 = vmatprep.subr.bf16.mxu0 0
        %901 = vmatpush1.bf16.msra.mxu0 0
        %902 = vmatprep.subr.bf16.mxu0 0
        %903 = vmatpush1.bf16.msra.mxu0 0
        %904 = vmatprep.subr.bf16.mxu0 0
        %905 = vmatpush1.bf16.msra.mxu0 0
        %906 = vmatprep.subr.bf16.mxu0 0
        %907 = vmatpush1.bf16.msra.mxu0 0
        %908 = vmatprep.subr.bf16.mxu0 0
        %909 = vmatpush1.bf16.msra.mxu0 %v890
        %910 = vmatprep.subr.bf16.mxu0 0
        %911 = vmatpush1.bf16.msra.mxu0 %v889
        %912 = vmatprep.subr.bf16.mxu0 0
        %913 = vmatpush2.bf16.msra.mxu0 0
        %914 = vmatprep.subr.bf16.mxu0 0
        %915 = vmatpush2.bf16.msra.mxu0 0
        %916 = vmatprep.subr.bf16.mxu0 0
        %917 = vmatpush2.bf16.msra.mxu0 0
        %918 = vmatprep.subr.bf16.mxu0 0
        %919 = vmatpush2.bf16.msra.mxu0 0
        %920 = vmatprep.subr.bf16.mxu0 0
        %921 = vmatpush2.bf16.msra.mxu0 0
        %922 = vmatprep.subr.bf16.mxu0 0
        %923 = vmatpush2.bf16.msra.mxu0 0
        %924 = vmatprep.subr.bf16.mxu0 0
        %925 = vmatpush2.bf16.msra.mxu0 0
        %926 = vmatprep.subr.bf16.mxu0 0
        %927 = vmatpush2.bf16.msra.mxu0 0
        %928 = vmatprep.mubr.bf16.mxu0 0
        %929 = vmatmul.mubr.bf16.gmra.mxu0 %v894
        %v930 = vpop.f32.mrf.mxu0
        %v931 = vadd.f32 %v879, %v930
        %v932 = vpop.f32.mrf.mxu0
        %v933 = vpop.f32.mrf.mxu0
        %v934 = vpop.f32.mrf.mxu0
        %935 = vdwg.mxu0
        %v936 = vld [vmem:[%s684] sm:$0x1]
        %v937 = vmul.f32 %v931, 0.25
        %v938 = vpack.c.bf16 %v937, %v937
        %v939 = vpack.c.bf16 %v931, %v931
        %v941 = vlaneseq
        %v942 = vshrl.u32 %v941, 7
        %v943 = vsub.s32 0, %v942
        %v944 = vrot.slane %v936, %v943
        %947 = vrot.lane.b32.xlu0 %v939, 96
        %v948 = vpop.permute.xlu0 %947
        %vm949 = vcmask 130048
        %v951 = vsel %vm949, %v938, 0
        %v954 = vsel %vm949, %v948, 0
        %956 = vmatprep.subr.bf16.mxu0 0
        %957 = vmatpush1.bf16.xpose.msra.mxu0 0
        %958 = vmatprep.subr.bf16.mxu0 0
        %959 = vmatpush1.bf16.xpose.msra.mxu0 0
        %960 = vmatprep.subr.bf16.mxu0 0
        %961 = vmatpush1.bf16.xpose.msra.mxu0 0
        %962 = vmatprep.subr.bf16.mxu0 0
        %963 = vmatpush1.bf16.xpose.msra.mxu0 0
        %964 = vmatprep.subr.bf16.mxu0 0
        %965 = vmatpush1.bf16.xpose.msra.mxu0 0
        %966 = vmatprep.subr.bf16.mxu0 0
        %967 = vmatpush1.bf16.xpose.msra.mxu0 0
        %968 = vmatprep.subr.bf16.mxu0 0
        %969 = vmatpush1.bf16.xpose.msra.mxu0 0
        %970 = vmatprep.subr.bf16.mxu0 0
        %971 = vmatpush1.bf16.xpose.msra.mxu0 %v954
        %972 = vmatprep.subr.bf16.mxu0 0
        %973 = vmatpush2.bf16.xpose.msra.mxu0 0
        %974 = vmatprep.subr.bf16.mxu0 0
        %975 = vmatpush2.bf16.xpose.msra.mxu0 0
        %976 = vmatprep.subr.bf16.mxu0 0
        %977 = vmatpush2.bf16.xpose.msra.mxu0 0
        %978 = vmatprep.subr.bf16.mxu0 0
        %979 = vmatpush2.bf16.xpose.msra.mxu0 0
        %980 = vmatprep.subr.bf16.mxu0 0
        %981 = vmatpush2.bf16.xpose.msra.mxu0 0
        %982 = vmatprep.subr.bf16.mxu0 0
        %983 = vmatpush2.bf16.xpose.msra.mxu0 0
        %984 = vmatprep.subr.bf16.mxu0 0
        %985 = vmatpush2.bf16.xpose.msra.mxu0 0
        %986 = vmatprep.subr.bf16.mxu0 0
        %987 = vmatpush2.bf16.xpose.msra.mxu0 0
        %988 = vmatprep.mubr.bf16.mxu0 0
        %989 = vmatmul.mubr.bf16.gmra.mxu0 %v951
        %v990 = vpop.f32.mrf.mxu0
        %v991 = vadd.f32 %v944, %v990
        %v992 = vpop.f32.mrf.mxu0
        %v993 = vpop.f32.mrf.mxu0
        %v994 = vpop.f32.mrf.mxu0
        %995 = vdwg.mxu0
        %vm996 = vcmask 64512
        %v997 = vsel %vm996, %v991, -inf
        %998 = vmax.xlane.f32.xlu0 %v997
        %v999 = vpop.xlane.xlu0 %998
        %v1000 = vsub.f32 -inf, %v999
        %v1001 = vmul.f32 %v1000, 1.442695
        %v1002 = vpow.pop %v1001
        %v1003 = vsub.f32 %v991, %v999
        %v1004 = vmul.f32 %v1003, 1.442695
        %v1005 = vpow.pop %v1004
        %v1006 = vmul.f32 %v1002, 0.0
        %v1007 = vsel %vm996, %v1005, 0.0
        %1008 = vadd.xlane.f32.xlu0 %v1007
        %v1009 = vpop.xlane.xlu0 %1008
        %v1010 = vadd.f32 %v1006, %v1009
        %v1011 = vpack.c.bf16 %v1005, %v1005
        %1012 = vrot.lane.b32.xlu0 %v939, 64
        %v1013 = vpop.permute.xlu0 %1012
        %v1015 = vsel %vm996, %v1011, 0
        %vm1017 = vcmask 1043456
        %v1019 = vsel %vm1017, %v1013, 0
        %1021 = vmatprep.subr.bf16.mxu0 0
        %1022 = vmatpush1.bf16.msra.mxu0 0
        %1023 = vmatprep.subr.bf16.mxu0 0
        %1024 = vmatpush1.bf16.msra.mxu0 0
        %1025 = vmatprep.subr.bf16.mxu0 0
        %1026 = vmatpush1.bf16.msra.mxu0 0
        %1027 = vmatprep.subr.bf16.mxu0 0
        %1028 = vmatpush1.bf16.msra.mxu0 0
        %1029 = vmatprep.subr.bf16.mxu0 0
        %1030 = vmatpush1.bf16.msra.mxu0 0
        %1031 = vmatprep.subr.bf16.mxu0 0
        %1032 = vmatpush1.bf16.msra.mxu0 0
        %1033 = vmatprep.subr.bf16.mxu0 0
        %1034 = vmatpush1.bf16.msra.mxu0 0
        %1035 = vmatprep.subr.bf16.mxu0 0
        %1036 = vmatpush1.bf16.msra.mxu0 %v1019
        %1037 = vmatprep.subr.bf16.mxu0 0
        %1038 = vmatpush2.bf16.msra.mxu0 0
        %1039 = vmatprep.subr.bf16.mxu0 0
        %1040 = vmatpush2.bf16.msra.mxu0 0
        %1041 = vmatprep.subr.bf16.mxu0 0
        %1042 = vmatpush2.bf16.msra.mxu0 0
        %1043 = vmatprep.subr.bf16.mxu0 0
        %1044 = vmatpush2.bf16.msra.mxu0 0
        %1045 = vmatprep.subr.bf16.mxu0 0
        %1046 = vmatpush2.bf16.msra.mxu0 0
        %1047 = vmatprep.subr.bf16.mxu0 0
        %1048 = vmatpush2.bf16.msra.mxu0 0
        %1049 = vmatprep.subr.bf16.mxu0 0
        %1050 = vmatpush2.bf16.msra.mxu0 0
        %1051 = vmatprep.subr.bf16.mxu0 0
        %1052 = vmatpush2.bf16.msra.mxu0 0
        %1053 = vmatprep.mubr.bf16.mxu0 0
        %1054 = vmatmul.mubr.bf16.gmra.mxu0 %v1015
        %v1055 = vpop.f32.mrf.mxu0
        %v1056 = vadd.f32 0.0, %v1055
        %v1057 = vpop.f32.mrf.mxu0
        %v1058 = vpop.f32.mrf.mxu0
        %v1059 = vpop.f32.mrf.mxu0
        %1060 = vdwg.mxu0
        %v1061 = vadd.f32 %v1006, %v1056
        %v1062 = vrcp.pop %v1010
        %v1063 = vmul.f32 %v1061, %v1062
        %v1064 = vpack.c.bf16 %v1063, %v1063
        %v1065 = vld [vmem:[%s797] sm:$0xf]
        %v1066 = vld [vmem:[%s797 + $0x4] sm:$0xf]
        %1068 = vrot.lane.b32.xlu0 %v938, 112
        %v1069 = vpop.permute.xlu0 %1068
        %1070 = vrot.lane.b32.xlu0 %v939, 80
        %v1071 = vpop.permute.xlu0 %1070
        %v1073 = vsel %vm949, %v1069, 0
        %v1076 = vsel %vm949, %v1071, 0
        %1078 = vmatprep.subr.bf16.mxu0 0
        %1079 = vmatpush1.bf16.xpose.msra.mxu0 0
        %1080 = vmatprep.subr.bf16.mxu0 0
        %1081 = vmatpush1.bf16.xpose.msra.mxu0 0
        %1082 = vmatprep.subr.bf16.mxu0 0
        %1083 = vmatpush1.bf16.xpose.msra.mxu0 0
        %1084 = vmatprep.subr.bf16.mxu0 0
        %1085 = vmatpush1.bf16.xpose.msra.mxu0 0
        %1086 = vmatprep.subr.bf16.mxu0 0
        %1087 = vmatpush1.bf16.xpose.msra.mxu0 0
        %1088 = vmatprep.subr.bf16.mxu0 0
        %1089 = vmatpush1.bf16.xpose.msra.mxu0 0
        %1090 = vmatprep.subr.bf16.mxu0 0
        %1091 = vmatpush1.bf16.xpose.msra.mxu0 0
        %1092 = vmatprep.subr.bf16.mxu0 0
        %1093 = vmatpush1.bf16.xpose.msra.mxu0 %v1076
        %1094 = vmatprep.subr.bf16.mxu0 0
        %1095 = vmatpush2.bf16.xpose.msra.mxu0 0
        %1096 = vmatprep.subr.bf16.mxu0 0
        %1097 = vmatpush2.bf16.xpose.msra.mxu0 0
        %1098 = vmatprep.subr.bf16.mxu0 0
        %1099 = vmatpush2.bf16.xpose.msra.mxu0 0
        %1100 = vmatprep.subr.bf16.mxu0 0
        %1101 = vmatpush2.bf16.xpose.msra.mxu0 0
        %1102 = vmatprep.subr.bf16.mxu0 0
        %1103 = vmatpush2.bf16.xpose.msra.mxu0 0
        %1104 = vmatprep.subr.bf16.mxu0 0
        %1105 = vmatpush2.bf16.xpose.msra.mxu0 0
        %1106 = vmatprep.subr.bf16.mxu0 0
        %1107 = vmatpush2.bf16.xpose.msra.mxu0 0
        %1108 = vmatprep.subr.bf16.mxu0 0
        %1109 = vmatpush2.bf16.xpose.msra.mxu0 0
        %1110 = vmatprep.mubr.bf16.mxu0 0
        %1111 = vmatmul.mubr.bf16.gmra.mxu0 %v1073
        %v1112 = vpop.f32.mrf.mxu0
        %v1113 = vadd.f32 %v944, %v1112
        %v1114 = vpop.f32.mrf.mxu0
        %v1115 = vpop.f32.mrf.mxu0
        %v1116 = vpop.f32.mrf.mxu0
        %1117 = vdwg.mxu0
        %v1118 = vsel %vm996, %v1113, -inf
        %1119 = vmax.xlane.f32.xlu0 %v1118
        %v1120 = vpop.xlane.xlu0 %1119
        %v1121 = vsub.f32 -inf, %v1120
        %v1122 = vmul.f32 %v1121, 1.442695
        %v1123 = vpow.pop %v1122
        %v1124 = vsub.f32 %v1113, %v1120
        %v1125 = vmul.f32 %v1124, 1.442695
        %v1126 = vpow.pop %v1125
        %v1127 = vmul.f32 %v1123, 0.0
        %v1128 = vsel %vm996, %v1126, 0.0
        %1129 = vadd.xlane.f32.xlu0 %v1128
        %v1130 = vpop.xlane.xlu0 %1129
        %v1131 = vadd.f32 %v1127, %v1130
        %v1132 = vpack.c.bf16 %v1126, %v1126
        %1133 = vrot.lane.b32.xlu0 %v939, 48
        %v1134 = vpop.permute.xlu0 %1133
        %v1136 = vsel %vm996, %v1132, 0
        %v1139 = vsel %vm1017, %v1134, 0
        %1141 = vmatprep.subr.bf16.mxu0 0
        %1142 = vmatpush1.bf16.msra.mxu0 0
        %1143 = vmatprep.subr.bf16.mxu0 0
        %1144 = vmatpush1.bf16.msra.mxu0 0
        %1145 = vmatprep.subr.bf16.mxu0 0
        %1146 = vmatpush1.bf16.msra.mxu0 0
        %1147 = vmatprep.subr.bf16.mxu0 0
        %1148 = vmatpush1.bf16.msra.mxu0 0
        %1149 = vmatprep.subr.bf16.mxu0 0
        %1150 = vmatpush1.bf16.msra.mxu0 0
        %1151 = vmatprep.subr.bf16.mxu0 0
        %1152 = vmatpush1.bf16.msra.mxu0 0
        %1153 = vmatprep.subr.bf16.mxu0 0
        %1154 = vmatpush1.bf16.msra.mxu0 0
        %1155 = vmatprep.subr.bf16.mxu0 0
        %1156 = vmatpush1.bf16.msra.mxu0 %v1139
        %1157 = vmatprep.subr.bf16.mxu0 0
        %1158 = vmatpush2.bf16.msra.mxu0 0
        %1159 = vmatprep.subr.bf16.mxu0 0
        %1160 = vmatpush2.bf16.msra.mxu0 0
        %1161 = vmatprep.subr.bf16.mxu0 0
        %1162 = vmatpush2.bf16.msra.mxu0 0
        %1163 = vmatprep.subr.bf16.mxu0 0
        %1164 = vmatpush2.bf16.msra.mxu0 0
        %1165 = vmatprep.subr.bf16.mxu0 0
        %1166 = vmatpush2.bf16.msra.mxu0 0
        %1167 = vmatprep.subr.bf16.mxu0 0
        %1168 = vmatpush2.bf16.msra.mxu0 0
        %1169 = vmatprep.subr.bf16.mxu0 0
        %1170 = vmatpush2.bf16.msra.mxu0 0
        %1171 = vmatprep.subr.bf16.mxu0 0
        %1172 = vmatpush2.bf16.msra.mxu0 0
        %1173 = vmatprep.mubr.bf16.mxu0 0
        %1174 = vmatmul.mubr.bf16.gmra.mxu0 %v1136
        %v1175 = vpop.f32.mrf.mxu0
        %v1176 = vadd.f32 0.0, %v1175
        %v1177 = vpop.f32.mrf.mxu0
        %v1178 = vpop.f32.mrf.mxu0
        %v1179 = vpop.f32.mrf.mxu0
        %1180 = vdwg.mxu0
        %v1181 = vadd.f32 %v1127, %v1176
        %v1182 = vrcp.pop %v1131
        %v1183 = vmul.f32 %v1181, %v1182
        %v1184 = vpack.c.bf16 %v1183, %v1183
        %s1185 = scalar_lea.vmem %s797, 8
        %v1186 = vld [vmem:[%s1185] sm:$0xf]
        %v1187 = vld [vmem:[%s1185 + $0x4] sm:$0xf]
        %v1190 = vunpack.c.l.b16 %v1186
        %v1191 = vunpack.c.l.b16 %v1187
        %v1192 = vpack.c.b16 %v1191, %v1190
        %v1195 = vsel %vm949, %v1184, 0
        %1197 = vmatprep.subr.bf16.mxu0 0
        %1198 = vmatpush1.bf16.msra.mxu0 0
        %1199 = vmatprep.subr.bf16.mxu0 0
        %1200 = vmatpush1.bf16.msra.mxu0 0
        %1201 = vmatprep.subr.bf16.mxu0 0
        %1202 = vmatpush1.bf16.msra.mxu0 0
        %1203 = vmatprep.subr.bf16.mxu0 0
        %1204 = vmatpush1.bf16.msra.mxu0 0
        %1205 = vmatprep.subr.bf16.mxu0 0
        %1206 = vmatpush1.bf16.msra.mxu0 0
        %1207 = vmatprep.subr.bf16.mxu0 0
        %1208 = vmatpush1.bf16.msra.mxu0 0
        %1209 = vmatprep.subr.bf16.mxu0 0
        %1210 = vmatpush1.bf16.msra.mxu0 0
        %1211 = vmatprep.subr.bf16.mxu0 0
        %1212 = vmatpush1.bf16.msra.mxu0 %v1192
        %1213 = vmatprep.subr.bf16.mxu0 0
        %1214 = vmatpush2.bf16.msra.mxu0 0
        %1215 = vmatprep.subr.bf16.mxu0 0
        %1216 = vmatpush2.bf16.msra.mxu0 0
        %1217 = vmatprep.subr.bf16.mxu0 0
        %1218 = vmatpush2.bf16.msra.mxu0 0
        %1219 = vmatprep.subr.bf16.mxu0 0
        %1220 = vmatpush2.bf16.msra.mxu0 0
        %1221 = vmatprep.subr.bf16.mxu0 0
        %1222 = vmatpush2.bf16.msra.mxu0 0
        %1223 = vmatprep.subr.bf16.mxu0 0
        %1224 = vmatpush2.bf16.msra.mxu0 0
        %1225 = vmatprep.subr.bf16.mxu0 0
        %1226 = vmatpush2.bf16.msra.mxu0 0
        %1227 = vmatprep.subr.bf16.mxu0 0
        %1228 = vmatpush2.bf16.msra.mxu0 0
        %1229 = vmatprep.mubr.bf16.mxu0 0
        %1230 = vmatmul.mubr.bf16.gmra.mxu0 %v1195
        %v1231 = vpop.f32.mrf.mxu0
        %v1232 = vadd.f32 0.0, %v1231
        %v1233 = vpop.f32.mrf.mxu0
        %v1234 = vpop.f32.mrf.mxu0
        %v1235 = vpop.f32.mrf.mxu0
        %1236 = vdwg.mxu0
        %v1239 = vunpack.c.l.b16 %v1065
        %v1240 = vunpack.c.l.b16 %v1066
        %v1241 = vpack.c.b16 %v1240, %v1239
        %v1244 = vsel %vm949, %v1064, 0
        %1246 = vmatprep.subr.bf16.mxu0 0
        %1247 = vmatpush1.bf16.msra.mxu0 0
        %1248 = vmatprep.subr.bf16.mxu0 0
        %1249 = vmatpush1.bf16.msra.mxu0 0
        %1250 = vmatprep.subr.bf16.mxu0 0
        %1251 = vmatpush1.bf16.msra.mxu0 0
        %1252 = vmatprep.subr.bf16.mxu0 0
        %1253 = vmatpush1.bf16.msra.mxu0 0
        %1254 = vmatprep.subr.bf16.mxu0 0
        %1255 = vmatpush1.bf16.msra.mxu0 0
        %1256 = vmatprep.subr.bf16.mxu0 0
        %1257 = vmatpush1.bf16.msra.mxu0 0
        %1258 = vmatprep.subr.bf16.mxu0 0
        %1259 = vmatpush1.bf16.msra.mxu0 0
        %1260 = vmatprep.subr.bf16.mxu0 0
        %1261 = vmatpush1.bf16.msra.mxu0 %v1241
        %1262 = vmatprep.subr.bf16.mxu0 0
        %1263 = vmatpush2.bf16.msra.mxu0 0
        %1264 = vmatprep.subr.bf16.mxu0 0
        %1265 = vmatpush2.bf16.msra.mxu0 0
        %1266 = vmatprep.subr.bf16.mxu0 0
        %1267 = vmatpush2.bf16.msra.mxu0 0
        %1268 = vmatprep.subr.bf16.mxu0 0
        %1269 = vmatpush2.bf16.msra.mxu0 0
        %1270 = vmatprep.subr.bf16.mxu0 0
        %1271 = vmatpush2.bf16.msra.mxu0 0
        %1272 = vmatprep.subr.bf16.mxu0 0
        %1273 = vmatpush2.bf16.msra.mxu0 0
        %1274 = vmatprep.subr.bf16.mxu0 0
        %1275 = vmatpush2.bf16.msra.mxu0 0
        %1276 = vmatprep.subr.bf16.mxu0 0
        %1277 = vmatpush2.bf16.msra.mxu0 0
        %1278 = vmatprep.mubr.bf16.mxu0 0
        %1279 = vmatmul.mubr.bf16.gmra.mxu0 %v1244
        %v1280 = vpop.f32.mrf.mxu0
        %v1281 = vadd.f32 %v1232, %v1280
        %v1282 = vpop.f32.mrf.mxu0
        %v1283 = vpop.f32.mrf.mxu0
        %v1284 = vpop.f32.mrf.mxu0
        %1285 = vdwg.mxu0
        %v1286 = vld [vmem:[%s800] sm:$0x1]
        %v1288 = vlaneseq
        %v1289 = vshrl.u32 %v1288, 7
        %v1290 = vsub.s32 0, %v1289
        %v1291 = vrot.slane %v1286, %v1290
        %v1293 = vadd.f32 %v1281, %v1291
        %v1294 = vadd.f32 %v1293, %v837
        %v1295 = vld [vmem:[%s14] sm:$0x1]
        %v1296 = vld [vmem:[%s15] sm:$0x1]
        %v1297 = vsel %vm840, %v1294, 0.0
        %1298 = vadd.xlane.f32.xlu0 %v1297
        %v1299 = vpop.xlane.xlu0 %1298
        %v1300 = vmul.f32 %v1299, %v844
        %v1301 = vsub.f32 %v1294, %v1300
        %v1302 = vmul.f32 %v1301, %v1301
        %v1303 = vsel %vm840, %v1302, 0.0
        %1304 = vadd.xlane.f32.xlu0 %v1303
        %v1305 = vpop.xlane.xlu0 %1304
        %v1306 = vmul.f32 %v1305, %v844
        %v1307 = vadd.f32 %v1306, 1e-05
        %v1308 = vrsqrt.pop %v1307
        %v1309 = vmul.f32 %v1301, %v1308
        %v1311 = vlaneseq
        %v1312 = vshrl.u32 %v1311, 7
        %v1313 = vsub.s32 0, %v1312
        %v1314 = vrot.slane %v1295, %v1313
        %v1316 = vmul.f32 %v1309, %v1314
        %v1318 = vlaneseq
        %v1319 = vshrl.u32 %v1318, 7
        %v1320 = vsub.s32 0, %v1319
        %v1321 = vrot.slane %v1296, %v1320
        %v1323 = vadd.f32 %v1316, %v1321
        %v1324 = vld [vmem:[%s809] sm:$0x1]
        %v1325 = vld [vmem:[%s812] sm:$0x1]
        %v1326 = vsel %vm840, %v1323, 0.0
        %1327 = vadd.xlane.f32.xlu0 %v1326
        %v1328 = vpop.xlane.xlu0 %1327
        %v1329 = vmul.f32 %v1328, %v844
        %v1330 = vsub.f32 %v1323, %v1329
        %v1331 = vmul.f32 %v1330, %v1330
        %v1332 = vsel %vm840, %v1331, 0.0
        %1333 = vadd.xlane.f32.xlu0 %v1332
        %v1334 = vpop.xlane.xlu0 %1333
        %v1335 = vmul.f32 %v1334, %v844
        %v1336 = vadd.f32 %v1335, 1e-05
        %v1337 = vrsqrt.pop %v1336
        %v1338 = vmul.f32 %v1330, %v1337
        %v1340 = vlaneseq
        %v1341 = vshrl.u32 %v1340, 7
        %v1342 = vsub.s32 0, %v1341
        %v1343 = vrot.slane %v1324, %v1342
        %v1345 = vmul.f32 %v1338, %v1343
        %v1347 = vlaneseq
        %v1348 = vshrl.u32 %v1347, 7
        %v1349 = vsub.s32 0, %v1348
        %v1350 = vrot.slane %v1325, %v1349
        %v1352 = vadd.f32 %v1345, %v1350
        %v1353 = vpack.c.bf16 %v1352, %v1352
        %v1354 = vld [vmem:[%s817] sm:$0xf]
        %v1355 = vld [vmem:[%s817 + $0x4] sm:$0xf]
        %v1356 = vld [vmem:[%s817 + $0x8] sm:$0xf]
        %v1357 = vld [vmem:[%s817 + $0xc] sm:$0xf]
        %v1358 = vld [vmem:[%s820] sm:$0x1]
        %v1360 = vlaneseq
        %v1361 = vshrl.u32 %v1360, 7
        %v1362 = vsub.s32 0, %v1361
        %v1363 = vrot.slane %v1358, %v1362
        %v1369 = vunpack.c.l.b16 %v1354
        %v1370 = vunpack.c.l.b16 %v1355
        %v1371 = vunpack.c.l.b16 %v1356
        %v1372 = vunpack.c.l.b16 %v1357
        %v1373 = vpack.c.b16 %v1370, %v1369
        %v1374 = vpack.c.b16 %v1372, %v1371
        %v1378 = vsel %vm840, %v1353, 0
        %1380 = vmatprep.subr.bf16.mxu0 0
        %1381 = vmatpush1.bf16.msra.mxu0 0
        %1382 = vmatprep.subr.bf16.mxu0 0
        %1383 = vmatpush1.bf16.msra.mxu0 0
        %1384 = vmatprep.subr.bf16.mxu0 0
        %1385 = vmatpush1.bf16.msra.mxu0 0
        %1386 = vmatprep.subr.bf16.mxu0 0
        %1387 = vmatpush1.bf16.msra.mxu0 0
        %1388 = vmatprep.subr.bf16.mxu0 0
        %1389 = vmatpush1.bf16.msra.mxu0 0
        %1390 = vmatprep.subr.bf16.mxu0 0
        %1391 = vmatpush1.bf16.msra.mxu0 0
        %1392 = vmatprep.subr.bf16.mxu0 0
        %1393 = vmatpush1.bf16.msra.mxu0 %v1374
        %1394 = vmatprep.subr.bf16.mxu0 0
        %1395 = vmatpush1.bf16.msra.mxu0 %v1373
        %1396 = vmatprep.subr.bf16.mxu0 0
        %1397 = vmatpush2.bf16.msra.mxu0 0
        %1398 = vmatprep.subr.bf16.mxu0 0
        %1399 = vmatpush2.bf16.msra.mxu0 0
        %1400 = vmatprep.subr.bf16.mxu0 0
        %1401 = vmatpush2.bf16.msra.mxu0 0
        %1402 = vmatprep.subr.bf16.mxu0 0
        %1403 = vmatpush2.bf16.msra.mxu0 0
        %1404 = vmatprep.subr.bf16.mxu0 0
        %1405 = vmatpush2.bf16.msra.mxu0 0
        %1406 = vmatprep.subr.bf16.mxu0 0
        %1407 = vmatpush2.bf16.msra.mxu0 0
        %1408 = vmatprep.subr.bf16.mxu0 0
        %1409 = vmatpush2.bf16.msra.mxu0 0
        %1410 = vmatprep.subr.bf16.mxu0 0
        %1411 = vmatpush2.bf16.msra.mxu0 0
        %1412 = vmatprep.mubr.bf16.mxu0 0
        %1413 = vmatmul.mubr.bf16.gmra.mxu0 %v1378
        %v1414 = vpop.f32.mrf.mxu0
        %v1415 = vadd.f32 %v1363, %v1414
        %v1416 = vpop.f32.mrf.mxu0
        %v1417 = vpop.f32.mrf.mxu0
        %v1418 = vpop.f32.mrf.mxu0
        %1419 = vdwg.mxu0
        %v1420 = vmul.f32 %v1415, 0.5
        %v1421 = vmul.f32 %v1415, 0.70710677
        %v1422 = verf.f32.pop %v1421
        %v1423 = vadd.f32 %v1422, 1.0
        %v1424 = vmul.f32 %v1420, %v1423
        %v1425 = vpack.c.bf16 %v1424, %v1424
        %v1426 = vld [vmem:[%s825] sm:$0xf]
        %v1427 = vld [vmem:[%s825 + $0x4] sm:$0xf]
        %v1428 = vld [vmem:[%s825 + $0x8] sm:$0xf]
        %v1429 = vld [vmem:[%s825 + $0xc] sm:$0xf]
        %v1430 = vld [vmem:[%s825 + $0x10] sm:$0xf]
        %v1431 = vld [vmem:[%s825 + $0x14] sm:$0xf]
        %v1432 = vld [vmem:[%s825 + $0x18] sm:$0xf]
        %v1433 = vld [vmem:[%s825 + $0x1c] sm:$0xf]
        %v1434 = vld [vmem:[%s828] sm:$0x1]
        %v1436 = vlaneseq
        %v1437 = vshrl.u32 %v1436, 7
        %v1438 = vsub.s32 0, %v1437
        %v1439 = vrot.slane %v1434, %v1438
        %v1449 = vunpack.c.l.b16 %v1426
        %v1450 = vunpack.c.l.b16 %v1427
        %v1451 = vunpack.c.l.b16 %v1428
        %v1452 = vunpack.c.l.b16 %v1429
        %v1453 = vunpack.c.l.b16 %v1430
        %v1454 = vunpack.c.l.b16 %v1431
        %v1455 = vunpack.c.l.b16 %v1432
        %v1456 = vunpack.c.l.b16 %v1433
        %v1457 = vpack.c.b16 %v1450, %v1449
        %v1458 = vpack.c.b16 %v1452, %v1451
        %v1459 = vpack.c.b16 %v1454, %v1453
        %v1460 = vpack.c.b16 %v1456, %v1455
        %vm1465 = vcmask 523264
        %v1467 = vsel %vm1465, %v1425, 0
        %1469 = vmatprep.subr.bf16.mxu0 0
        %1470 = vmatpush1.bf16.msra.mxu0 0
        %1471 = vmatprep.subr.bf16.mxu0 0
        %1472 = vmatpush1.bf16.msra.mxu0 0
        %1473 = vmatprep.subr.bf16.mxu0 0
        %1474 = vmatpush1.bf16.msra.mxu0 0
        %1475 = vmatprep.subr.bf16.mxu0 0
        %1476 = vmatpush1.bf16.msra.mxu0 0
        %1477 = vmatprep.subr.bf16.mxu0 0
        %1478 = vmatpush1.bf16.msra.mxu0 %v1460
        %1479 = vmatprep.subr.bf16.mxu0 0
        %1480 = vmatpush1.bf16.msra.mxu0 %v1459
        %1481 = vmatprep.subr.bf16.mxu0 0
        %1482 = vmatpush1.bf16.msra.mxu0 %v1458
        %1483 = vmatprep.subr.bf16.mxu0 0
        %1484 = vmatpush1.bf16.msra.mxu0 %v1457
        %1485 = vmatprep.subr.bf16.mxu0 0
        %1486 = vmatpush2.bf16.msra.mxu0 0
        %1487 = vmatprep.subr.bf16.mxu0 0
        %1488 = vmatpush2.bf16.msra.mxu0 0
        %1489 = vmatprep.subr.bf16.mxu0 0
        %1490 = vmatpush2.bf16.msra.mxu0 0
        %1491 = vmatprep.subr.bf16.mxu0 0
        %1492 = vmatpush2.bf16.msra.mxu0 0
        %1493 = vmatprep.subr.bf16.mxu0 0
        %1494 = vmatpush2.bf16.msra.mxu0 0
        %1495 = vmatprep.subr.bf16.mxu0 0
        %1496 = vmatpush2.bf16.msra.mxu0 0
        %1497 = vmatprep.subr.bf16.mxu0 0
        %1498 = vmatpush2.bf16.msra.mxu0 0
        %1499 = vmatprep.subr.bf16.mxu0 0
        %1500 = vmatpush2.bf16.msra.mxu0 0
        %1501 = vmatprep.mubr.bf16.mxu0 0
        %1502 = vmatmul.mubr.bf16.gmra.mxu0 %v1467
        %v1503 = vpop.f32.mrf.mxu0
        %v1504 = vadd.f32 %v1439, %v1503
        %v1505 = vpop.f32.mrf.mxu0
        %v1506 = vpop.f32.mrf.mxu0
        %v1507 = vpop.f32.mrf.mxu0
        %1508 = vdwg.mxu0
        %v1509 = vadd.f32 %v1504, %v1323
        %v1510 = vld [vmem:[%s16] sm:$0x1]
        %v1511 = vld [vmem:[%s17] sm:$0x1]
        %v1512 = vsel %vm840, %v1509, 0.0
        %1513 = vadd.xlane.f32.xlu0 %v1512
        %v1514 = vpop.xlane.xlu0 %1513
        %v1515 = vmul.f32 %v1514, %v844
        %v1516 = vsub.f32 %v1509, %v1515
        %v1517 = vmul.f32 %v1516, %v1516
        %v1518 = vsel %vm840, %v1517, 0.0
        %1519 = vadd.xlane.f32.xlu0 %v1518
        %v1520 = vpop.xlane.xlu0 %1519
        %v1521 = vmul.f32 %v1520, %v844
        %v1522 = vadd.f32 %v1521, 1e-05
        %v1523 = vrsqrt.pop %v1522
        %v1524 = vmul.f32 %v1516, %v1523
        %v1526 = vlaneseq
        %v1527 = vshrl.u32 %v1526, 7
        %v1528 = vsub.s32 0, %v1527
        %v1529 = vrot.slane %v1510, %v1528
        %v1531 = vmul.f32 %v1524, %v1529
        %v1533 = vlaneseq
        %v1534 = vshrl.u32 %v1533, 7
        %v1535 = vsub.s32 0, %v1534
        %v1536 = vrot.slane %v1511, %v1535
        %v1538 = vadd.f32 %v1531, %v1536
        %1539 = vst.msk [vmem:[%s784] sm:$0xff] %vm840, %v1538
        %s1540 = sand.u32 %s506, 1
        %s1541 = scalar_lea.sflag [#allocation4], %s1540
        %s1542 = sand.u32 %s506, 1
        %s1543 = smul.addr %s1542, 8
        %s1544 = scalar_lea.vmem [#allocation7], %s1543
        // Predicated region
        $region105: #{tpu_custom_call.1} parent=91 // pred_check
          %p1545 = pneg %p516
        $region106: #{tpu_custom_call.1} parent=91 // pred_check_branch
          %1547 = sbr.rel (%p1545) target = $region108
        $region107: #{tpu_custom_call.1} parent=91 // pred_region
          %s1549 = ssub.s32 128, 128
          %1550 = vsyncadd %s1541, %s1549
          %s1551 = smul.addr %s42, 128
          %s1552 = scalar_lea.hbm %s18, %s1551
          %s1554 = sshll.u32 %s1544, 4
          %s1555 = int_to_ptr.vmem [resolvable:$true] %s1554
          %1557 = dma.vmem_to_hbm [thread:$0]  %s1555, 128, %s1552, %s1541
        $region108: #{tpu_custom_call.1} parent=91 // pred_fallthru
          _
      $region92: #{tpu_custom_call.1} parent=5 // pred_fallthru
        _
      %p1558 = scmp.le.s32.totalorder 2, %s33
      // Predicated region
      $region109: #{tpu_custom_call.1} parent=5 // pred_check
        %p1559 = pneg %p1558
      $region110: #{tpu_custom_call.1} parent=5 // pred_check_branch
        %1561 = sbr.rel (%p1559) target = $region112
      $region111: #{tpu_custom_call.1} parent=5 // pred_region
        %s1562 = ssub.s32 %s33, 2
        // Predicated region
        $region113: #{tpu_custom_call.1} parent=111 // pred_check
          %p1563 = pneg %p522
        $region114: #{tpu_custom_call.1} parent=111 // pred_check_branch
          %1565 = sbr.rel (%p1563) target = $region116
        $region115: #{tpu_custom_call.1} parent=111 // pred_region
          %s1566 = sand.u32 %s507, 1
          %s1567 = scalar_lea.sflag [#allocation4], %s1566
          %s1568 = sand.u32 %s507, 1
          %s1569 = smul.addr %s1568, 8
          %s1570 = scalar_lea.vmem [#allocation7], %s1569
          %1571 = dma.done %s1567, 128
        $region116: #{tpu_custom_call.1} parent=111 // pred_fallthru
          _
      $region112: #{tpu_custom_call.1} parent=5 // pred_fallthru
        _
    $region6: #{tpu_custom_call.1} parent=1 // loop_footer
      %s37 = sadd.s32 1, %s33
    $region7: #{tpu_custom_call.1} parent=1 // loop_footer_branch
      %32 = sbr.rel target = $region3
    $region8: #{tpu_custom_call.1} parent=1 // loop_exit
      _
    %1572 = vsyncpa [#allocation3], 1
    %s1573 = scalar_lea.sflag [#allocation3], 1
    %1574 = vsyncpa %s1573, 1
    %1575 = vsyncpa [#allocation6], 1
    %s1576 = scalar_lea.sflag [#allocation6], 1
    %1577 = vsyncpa %s1576, 1
    %1578 = vsyncpa [#allocation4], 1
    %s1579 = scalar_lea.sflag [#allocation4], 1
    %1580 = vsyncpa %s1579, 1

</llo_original>
